<compile_context>
chip_gen: v5e
topology: v5e:2x2
jax: 0.10.0
libtpu: 0.0.40
codegen_flags: <defaults>
</compile_context>

<pallas_src>
import functools

import jax
import jax.numpy as jnp
from jax import lax
from jax.experimental import pallas as pl
from jax.experimental.pallas import tpu as pltpu


def _round_up(x, m):
    return -(-x // m) * m


def lstm_fc_kernel(xp_ref, whh_ref, wfc_ref, bfc_ref, out_ref, h_sc, c_sc,
                   *, seq_len, time_block, mask_time, unroll):
    """One grid step == `time_block` LSTM time steps for one batch block.

    xp_ref : (time_block, B_blk, 4H) pre-activations  x_t @ W_ih + b   (gate order i,f,g,o)
    whh_ref: (H, 4H) recurrent weight, gates fused along lanes
    wfc_ref: (H, 256), bfc_ref: (1, 256) final Linear
    out_ref: (B_blk, 256) = relu(fc1(h_T))
    h_sc/c_sc: (B_blk, H) carried LSTM state (VMEM scratch, persists across the time grid axis)
    """
    tb = pl.program_id(1)

    @pl.when(tb == 0)
    def _():
        h_sc[...] = jnp.zeros_like(h_sc)
        c_sc[...] = jnp.zeros_like(c_sc)

    whh = whh_ref[...]                  # (H, 4H) -- hoisted load, reused by every step
    hidden = whh.shape[0]

    def step(tt, carry):
        h, c = carry
        # Single fused-gate MXU push per step: (B_blk, H) x (H, 4H); input part precomputed.
        pre = xp_ref[tt] + jnp.dot(h, whh, preferred_element_type=jnp.float32)
        i_g = jax.nn.sigmoid(pre[:, 0 * hidden:1 * hidden])
        f_g = jax.nn.sigmoid(pre[:, 1 * hidden:2 * hidden])
        g_g = jnp.tanh(pre[:, 2 * hidden:3 * hidden])
        o_g = jax.nn.sigmoid(pre[:, 3 * hidden:4 * hidden])
        c_new = f_g * c + i_g * g_g
        h_new = o_g * jnp.tanh(c_new)
        if mask_time:                   # static flag: only emitted when T was padded
            valid = (tb * time_block + tt) < seq_len
            h_new = jnp.where(valid, h_new, h)
            c_new = jnp.where(valid, c_new, c)
        return h_new, c_new

    h, c = lax.fori_loop(0, time_block, step, (h_sc[...], c_sc[...]),
                         unroll=unroll)
    h_sc[...] = h
    c_sc[...] = c

    @pl.when(tb == pl.num_programs(1) - 1)
    def _():
        y = jnp.dot(h, wfc_ref[...], preferred_element_type=jnp.float32) + bfc_ref[...]
        out_ref[...] = jnp.maximum(y, 0.0)


def drug_prot_lstm_forward(tokens, params, *, time_block=32):
    emb = params["embedding"]     # (charlen, E)
    wih = params["wih"]           # (E, 4H)   gate order [i, f, g, o]
    whh = params["whh"]           # (H, 4H)
    b = params["b"]               # (1, 4H)   == b_ih + b_hh
    wfc = params["wfc"]           # (H, 256)
    bfc = params["bfc"]           # (1, 256)

    B, T = tokens.shape
    E = emb.shape[1]
    H, G = whh.shape              # G == 4H
    OUT = wfc.shape[1]

    # Embedding gather directly in time-major order + input projection hoisted out of the
    # recurrence as one big, MXU-friendly matmul (bias folded in):  (T*B, E) @ (E, 4H) + b.
    x_tm = emb[tokens.T]                                            # (T, B, E)
    x_proj = (x_tm.reshape(T * B, E) @ wih + b).reshape(T, B, G)    # (T, B, 4H)

    # Pad batch to the f32 sublane count (8) and split into at most 2 blocks (leading
    # "parallel" grid axis -> v7x's two TensorCores); pad time to a multiple of the time block.
    B_pad = _round_up(B, 8)
    if B_pad > 8:
        bb = _round_up(B_pad // 2, 8)
        B_pad = 2 * bb
    else:
        bb = B_pad
    nb = B_pad // bb

    Tc = min(time_block, T)
    T_pad = _round_up(T, Tc)
    nt = T_pad // Tc

    if (T_pad, B_pad) != (T, B):
        x_proj = jnp.pad(x_proj, ((0, T_pad - T), (0, B_pad - B), (0, 0)))

    kernel = functools.partial(
        lstm_fc_kernel, seq_len=T, time_block=Tc,
        mask_time=(T_pad != T), unroll=(Tc <= 32))

    # Explicit VMEM budget (f32 bytes); matters on v7x (64 MiB physical / 32 MiB scoped default).
    def vmem_budget(weight_bufs):
        return 4 * (2 * Tc * bb * G                           # x_proj slab, double buffered
                    + weight_bufs * (H * G + H * OUT + OUT)   # whh + fc weights/bias
                    + 2 * bb * OUT                            # output block
                    + 2 * bb * H)                             # h/c scratch

    def build(single_buffer_weights):
        if single_buffer_weights:
            def wspec(shape, imap):
                return pl.BlockSpec(shape, imap, pipeline_mode=pl.Buffered(1))
            wbufs = 1
        else:
            wspec = pl.BlockSpec
            wbufs = 2
        limit = min(64 * 1024 * 1024,
                    max(2 * vmem_budget(wbufs), 16 * 1024 * 1024))
        return pl.pallas_call(
            kernel,
            out_shape=jax.ShapeDtypeStruct((B_pad, OUT), jnp.float32),
            grid_spec=pltpu.PrefetchScalarGridSpec(
                num_scalar_prefetch=0,
                grid=(nb, nt),
                in_specs=[
                    pl.BlockSpec((Tc, bb, G), lambda bi, ti: (ti, bi, 0)),  # pre-activations
                    wspec((H, G), lambda bi, ti: (0, 0)),                   # W_hh (fused gates)
                    wspec((H, OUT), lambda bi, ti: (0, 0)),                 # fc1 weight^T
                    wspec((1, OUT), lambda bi, ti: (0, 0)),                 # fc1 bias
                ],
                out_specs=pl.BlockSpec((bb, OUT), lambda bi, ti: (bi, 0)),
                scratch_shapes=[pltpu.VMEM((bb, H), jnp.float32),           # h state
                                pltpu.VMEM((bb, H), jnp.float32)],          # c state
            ),
            compiler_params=pltpu.CompilerParams(
                dimension_semantics=("parallel", "arbitrary"),
                vmem_limit_bytes=limit),
        )

    try:
        out_pad = build(True)(x_proj, whh, wfc, bfc)
    except Exception:
        # Fallback: some Pallas versions reject single-buffered (Buffered(1)) pipelined inputs.
        out_pad = build(False)(x_proj, whh, wfc, bfc)
    return out_pad[:B]


def reference_forward(tokens, params):
    """Pure-JAX reference mirroring torch.nn.LSTM gate math (fused [i,f,g,o] layout)."""
    emb = params["embedding"]
    wih, whh, bias = params["wih"], params["whh"], params["b"]
    wfc, bfc = params["wfc"], params["bfc"]
    B = tokens.shape[0]
    H = whh.shape[0]
    x_e = emb[tokens]                          # (B, T, E)

    def step(carry, x_t):
        h, c = carry
        pre = x_t @ wih + h @ whh + bias       # (B, 4H)
        i_g = jax.nn.sigmoid(pre[:, 0 * H:1 * H])
        f_g = jax.nn.sigmoid(pre[:, 1 * H:2 * H])
        g_g = jnp.tanh(pre[:, 2 * H:3 * H])
        o_g = jax.nn.sigmoid(pre[:, 3 * H:4 * H])
        c = f_g * c + i_g * g_g
        h = o_g * jnp.tanh(c)
        return (h, c), None

    h0 = jnp.zeros((B, H), jnp.float32)
    c0 = jnp.zeros((B, H), jnp.float32)
    (h_n, _), _ = lax.scan(step, (h0, c0), jnp.transpose(x_e, (1, 0, 2)))
    y = h_n @ wfc + bfc
    return jnp.maximum(y, 0.0)


def make_params(key, charlen, embedding_dim, hidden_dim, out_dim=256):
    ks = jax.random.split(key, 6)
    scale = 0.1
    return {
        "embedding": scale * jax.random.normal(ks[0], (charlen, embedding_dim), jnp.float32),
        # gate-fused weights, PyTorch LSTM gate order [i, f, g, o] along the last (lane) axis
        "wih": scale * jax.random.normal(ks[1], (embedding_dim, 4 * hidden_dim), jnp.float32),
        "whh": scale * jax.random.normal(ks[2], (hidden_dim, 4 * hidden_dim), jnp.float32),
        "b":   scale * jax.random.normal(ks[3], (1, 4 * hidden_dim), jnp.float32),  # b_ih + b_hh
        "wfc": scale * jax.random.normal(ks[4], (hidden_dim, out_dim), jnp.float32),
        "bfc": scale * jax.random.normal(ks[5], (1, out_dim), jnp.float32),
    }


if __name__ == "__main__":
    B, T = 2, 8
    charlen, embedding_dim, hidden_dim = 20, 32, 32

    key = jax.random.PRNGKey(0)
    k_tok, k_par = jax.random.split(key)
    tokens = jax.random.randint(k_tok, (B, T), 0, charlen, dtype=jnp.int32)
    params = make_params(k_par, charlen, embedding_dim, hidden_dim)

    out = drug_prot_lstm_forward(tokens, params)
    out = jax.block_until_ready(out)

    ref = reference_forward(tokens, params)
    assert out.shape == (B, 256)
    assert jnp.allclose(out, ref, atol=1e-5, rtol=1e-5), "mismatch vs JAX reference"
    print("KERNEL_OK")
</pallas_src>

<mosaic_0001>
module attributes {stable_mosaic.version = 11 : i64} {
  func.func @lstm_fc_kernel(%arg0: i32, %arg1: i32, %arg2: memref<8x8x128xf32, #tpu.memory_space<vmem>>, %arg3: memref<32x128xf32, #tpu.memory_space<vmem>>, %arg4: memref<32x256xf32, #tpu.memory_space<vmem>>, %arg5: memref<1x256xf32, #tpu.memory_space<vmem>>, %arg6: memref<8x256xf32, #tpu.memory_space<vmem>>, %arg7: memref<8x32xf32, #tpu.memory_space<vmem>>, %arg8: memref<8x32xf32, #tpu.memory_space<vmem>>) attributes {dimension_semantics = [#tpu.dimension_semantics<parallel>, #tpu.dimension_semantics<arbitrary>], iteration_bounds = array<i64: 1, 1>, scalar_prefetch = 0 : i64, scratch_operands = 2 : i64, tpu.core_type = #tpu.core_type<tc>, window_params = [{transform_indices = @transform_0, window_bounds = array<i64: 8, 8, 128>}, {pipeline_mode = #tpu.pipeline_mode<synchronous>, transform_indices = @transform_1, window_bounds = array<i64: 32, 128>}, {pipeline_mode = #tpu.pipeline_mode<synchronous>, transform_indices = @transform_2, window_bounds = array<i64: 32, 256>}, {pipeline_mode = #tpu.pipeline_mode<synchronous>, transform_indices = @transform_3, window_bounds = array<i64: 1, 256>}, {transform_indices = @transform_4, window_bounds = array<i64: 8, 256>}]} {
    %c0_i32 = arith.constant 0 : i32
    %0 = arith.cmpi eq, %arg1, %c0_i32 : i32
    %1 = arith.extui %0 : i1 to i32
    %c0_i32_0 = arith.constant 0 : i32
    %2 = arith.cmpi ne, %1, %c0_i32_0 : i32
    scf.if %2 {
      %cst_60 = arith.constant 0.000000e+00 : f32
      %251 = vector.broadcast %cst_60 : f32 to vector<8x32xf32>
      %c0_61 = arith.constant 0 : index
      %c0_62 = arith.constant 0 : index
      %252 = vector.load %arg7[%c0_61, %c0_62] : memref<8x32xf32, #tpu.memory_space<vmem>>, vector<8x32xf32>
      tpu.vector_store %arg7[%c0_61, %c0_62], %251 {strides = array<i32>} : memref<8x32xf32, #tpu.memory_space<vmem>>, vector<8x32xf32>,
      %cst_63 = arith.constant 0.000000e+00 : f32
      %253 = vector.broadcast %cst_63 : f32 to vector<8x32xf32>
      %c0_64 = arith.constant 0 : index
      %c0_65 = arith.constant 0 : index
      %254 = vector.load %arg8[%c0_64, %c0_65] : memref<8x32xf32, #tpu.memory_space<vmem>>, vector<8x32xf32>
      tpu.vector_store %arg8[%c0_64, %c0_65], %253 {strides = array<i32>} : memref<8x32xf32, #tpu.memory_space<vmem>>, vector<8x32xf32>,
    } else {
    }
    %c0 = arith.constant 0 : index
    %c0_1 = arith.constant 0 : index
    %3 = vector.load %arg3[%c0, %c0_1] : memref<32x128xf32, #tpu.memory_space<vmem>>, vector<32x128xf32>
    %c0_2 = arith.constant 0 : index
    %c0_3 = arith.constant 0 : index
    %4 = vector.load %arg7[%c0_2, %c0_3] : memref<8x32xf32, #tpu.memory_space<vmem>>, vector<8x32xf32>
    %c0_4 = arith.constant 0 : index
    %c0_5 = arith.constant 0 : index
    %5 = vector.load %arg8[%c0_4, %c0_5] : memref<8x32xf32, #tpu.memory_space<vmem>>, vector<8x32xf32>
    %c0_i32_6 = arith.constant 0 : i32
    %6 = arith.index_cast %c0_i32_6 : i32 to index
    %c0_7 = arith.constant 0 : index
    %c0_8 = arith.constant 0 : index
    %7 = vector.load %arg2[%6, %c0_7, %c0_8] : memref<8x8x128xf32, #tpu.memory_space<vmem>>, vector<1x8x128xf32>
    %8 = vector.shape_cast %7 : vector<1x8x128xf32> to vector<8x128xf32>
    %cst = arith.constant dense<0.000000e+00> : vector<8x128xf32>
    %9 = tpu.matmul %4, %3, %cst {dimension_numbers = #tpu.dot_dimension_numbers<[1], [0], [0], [1], [0, 0, 1, 1], [], []>} : vector<8x32xf32>, vector<32x128xf32>, vector<8x128xf32> -> vector<8x128xf32>
    %10 = arith.addf %8, %9 : vector<8x128xf32>
    %11 = vector.extract_strided_slice %10 {offsets = [0, 0], sizes = [8, 32], strides = [1, 1]} : vector<8x128xf32> to vector<8x32xf32>
    %12 = arith.negf %11 : vector<8x32xf32>
    %13 = math.exp %12 : vector<8x32xf32>
    %cst_9 = arith.constant 1.000000e+00 : f32
    %14 = vector.broadcast %cst_9 : f32 to vector<8x32xf32>
    %15 = arith.addf %14, %13 : vector<8x32xf32>
    %16 = arith.divf %14, %15 : vector<8x32xf32>
    %17 = vector.extract_strided_slice %10 {offsets = [0, 32], sizes = [8, 32], strides = [1, 1]} : vector<8x128xf32> to vector<8x32xf32>
    %18 = arith.negf %17 : vector<8x32xf32>
    %19 = math.exp %18 : vector<8x32xf32>
    %cst_10 = arith.constant 1.000000e+00 : f32
    %20 = vector.broadcast %cst_10 : f32 to vector<8x32xf32>
    %21 = arith.addf %20, %19 : vector<8x32xf32>
    %22 = arith.divf %20, %21 : vector<8x32xf32>
    %23 = vector.extract_strided_slice %10 {offsets = [0, 64], sizes = [8, 32], strides = [1, 1]} : vector<8x128xf32> to vector<8x32xf32>
    %24 = math.tanh %23 : vector<8x32xf32>
    %25 = vector.extract_strided_slice %10 {offsets = [0, 96], sizes = [8, 32], strides = [1, 1]} : vector<8x128xf32> to vector<8x32xf32>
    %26 = arith.negf %25 : vector<8x32xf32>
    %27 = math.exp %26 : vector<8x32xf32>
    %cst_11 = arith.constant 1.000000e+00 : f32
    %28 = vector.broadcast %cst_11 : f32 to vector<8x32xf32>
    %29 = arith.addf %28, %27 : vector<8x32xf32>
    %30 = arith.divf %28, %29 : vector<8x32xf32>
    %31 = arith.mulf %22, %5 : vector<8x32xf32>
    %32 = arith.mulf %16, %24 : vector<8x32xf32>
    %33 = arith.addf %31, %32 : vector<8x32xf32>
    %34 = math.tanh %33 : vector<8x32xf32>
    %35 = arith.mulf %30, %34 : vector<8x32xf32>
    %c1_i32 = arith.constant 1 : i32
    %36 = arith.index_cast %c1_i32 : i32 to index
    %c0_12 = arith.constant 0 : index
    %c0_13 = arith.constant 0 : index
    %37 = vector.load %arg2[%36, %c0_12, %c0_13] : memref<8x8x128xf32, #tpu.memory_space<vmem>>, vector<1x8x128xf32>
    %38 = vector.shape_cast %37 : vector<1x8x128xf32> to vector<8x128xf32>
    %cst_14 = arith.constant dense<0.000000e+00> : vector<8x128xf32>
    %39 = tpu.matmul %35, %3, %cst_14 {dimension_numbers = #tpu.dot_dimension_numbers<[1], [0], [0], [1], [0, 0, 1, 1], [], []>} : vector<8x32xf32>, vector<32x128xf32>, vector<8x128xf32> -> vector<8x128xf32>
    %40 = arith.addf %38, %39 : vector<8x128xf32>
    %41 = vector.extract_strided_slice %40 {offsets = [0, 0], sizes = [8, 32], strides = [1, 1]} : vector<8x128xf32> to vector<8x32xf32>
    %42 = arith.negf %41 : vector<8x32xf32>
    %43 = math.exp %42 : vector<8x32xf32>
    %cst_15 = arith.constant 1.000000e+00 : f32
    %44 = vector.broadcast %cst_15 : f32 to vector<8x32xf32>
    %45 = arith.addf %44, %43 : vector<8x32xf32>
    %46 = arith.divf %44, %45 : vector<8x32xf32>
    %47 = vector.extract_strided_slice %40 {offsets = [0, 32], sizes = [8, 32], strides = [1, 1]} : vector<8x128xf32> to vector<8x32xf32>
    %48 = arith.negf %47 : vector<8x32xf32>
    %49 = math.exp %48 : vector<8x32xf32>
    %cst_16 = arith.constant 1.000000e+00 : f32
    %50 = vector.broadcast %cst_16 : f32 to vector<8x32xf32>
    %51 = arith.addf %50, %49 : vector<8x32xf32>
    %52 = arith.divf %50, %51 : vector<8x32xf32>
    %53 = vector.extract_strided_slice %40 {offsets = [0, 64], sizes = [8, 32], strides = [1, 1]} : vector<8x128xf32> to vector<8x32xf32>
    %54 = math.tanh %53 : vector<8x32xf32>
    %55 = vector.extract_strided_slice %40 {offsets = [0, 96], sizes = [8, 32], strides = [1, 1]} : vector<8x128xf32> to vector<8x32xf32>
    %56 = arith.negf %55 : vector<8x32xf32>
    %57 = math.exp %56 : vector<8x32xf32>
    %cst_17 = arith.constant 1.000000e+00 : f32
    %58 = vector.broadcast %cst_17 : f32 to vector<8x32xf32>
    %59 = arith.addf %58, %57 : vector<8x32xf32>
    %60 = arith.divf %58, %59 : vector<8x32xf32>
    %61 = arith.mulf %52, %33 : vector<8x32xf32>
    %62 = arith.mulf %46, %54 : vector<8x32xf32>
    %63 = arith.addf %61, %62 : vector<8x32xf32>
    %64 = math.tanh %63 : vector<8x32xf32>
    %65 = arith.mulf %60, %64 : vector<8x32xf32>
    %c2_i32 = arith.constant 2 : i32
    %66 = arith.index_cast %c2_i32 : i32 to index
    %c0_18 = arith.constant 0 : index
    %c0_19 = arith.constant 0 : index
    %67 = vector.load %arg2[%66, %c0_18, %c0_19] : memref<8x8x128xf32, #tpu.memory_space<vmem>>, vector<1x8x128xf32>
    %68 = vector.shape_cast %67 : vector<1x8x128xf32> to vector<8x128xf32>
    %cst_20 = arith.constant dense<0.000000e+00> : vector<8x128xf32>
    %69 = tpu.matmul %65, %3, %cst_20 {dimension_numbers = #tpu.dot_dimension_numbers<[1], [0], [0], [1], [0, 0, 1, 1], [], []>} : vector<8x32xf32>, vector<32x128xf32>, vector<8x128xf32> -> vector<8x128xf32>
    %70 = arith.addf %68, %69 : vector<8x128xf32>
    %71 = vector.extract_strided_slice %70 {offsets = [0, 0], sizes = [8, 32], strides = [1, 1]} : vector<8x128xf32> to vector<8x32xf32>
    %72 = arith.negf %71 : vector<8x32xf32>
    %73 = math.exp %72 : vector<8x32xf32>
    %cst_21 = arith.constant 1.000000e+00 : f32
    %74 = vector.broadcast %cst_21 : f32 to vector<8x32xf32>
    %75 = arith.addf %74, %73 : vector<8x32xf32>
    %76 = arith.divf %74, %75 : vector<8x32xf32>
    %77 = vector.extract_strided_slice %70 {offsets = [0, 32], sizes = [8, 32], strides = [1, 1]} : vector<8x128xf32> to vector<8x32xf32>
    %78 = arith.negf %77 : vector<8x32xf32>
    %79 = math.exp %78 : vector<8x32xf32>
    %cst_22 = arith.constant 1.000000e+00 : f32
    %80 = vector.broadcast %cst_22 : f32 to vector<8x32xf32>
    %81 = arith.addf %80, %79 : vector<8x32xf32>
    %82 = arith.divf %80, %81 : vector<8x32xf32>
    %83 = vector.extract_strided_slice %70 {offsets = [0, 64], sizes = [8, 32], strides = [1, 1]} : vector<8x128xf32> to vector<8x32xf32>
    %84 = math.tanh %83 : vector<8x32xf32>
    %85 = vector.extract_strided_slice %70 {offsets = [0, 96], sizes = [8, 32], strides = [1, 1]} : vector<8x128xf32> to vector<8x32xf32>
    %86 = arith.negf %85 : vector<8x32xf32>
    %87 = math.exp %86 : vector<8x32xf32>
    %cst_23 = arith.constant 1.000000e+00 : f32
    %88 = vector.broadcast %cst_23 : f32 to vector<8x32xf32>
    %89 = arith.addf %88, %87 : vector<8x32xf32>
    %90 = arith.divf %88, %89 : vector<8x32xf32>
    %91 = arith.mulf %82, %63 : vector<8x32xf32>
    %92 = arith.mulf %76, %84 : vector<8x32xf32>
    %93 = arith.addf %91, %92 : vector<8x32xf32>
    %94 = math.tanh %93 : vector<8x32xf32>
    %95 = arith.mulf %90, %94 : vector<8x32xf32>
    %c3_i32 = arith.constant 3 : i32
    %96 = arith.index_cast %c3_i32 : i32 to index
    %c0_24 = arith.constant 0 : index
    %c0_25 = arith.constant 0 : index
    %97 = vector.load %arg2[%96, %c0_24, %c0_25] : memref<8x8x128xf32, #tpu.memory_space<vmem>>, vector<1x8x128xf32>
    %98 = vector.shape_cast %97 : vector<1x8x128xf32> to vector<8x128xf32>
    %cst_26 = arith.constant dense<0.000000e+00> : vector<8x128xf32>
    %99 = tpu.matmul %95, %3, %cst_26 {dimension_numbers = #tpu.dot_dimension_numbers<[1], [0], [0], [1], [0, 0, 1, 1], [], []>} : vector<8x32xf32>, vector<32x128xf32>, vector<8x128xf32> -> vector<8x128xf32>
    %100 = arith.addf %98, %99 : vector<8x128xf32>
    %101 = vector.extract_strided_slice %100 {offsets = [0, 0], sizes = [8, 32], strides = [1, 1]} : vector<8x128xf32> to vector<8x32xf32>
    %102 = arith.negf %101 : vector<8x32xf32>
    %103 = math.exp %102 : vector<8x32xf32>
    %cst_27 = arith.constant 1.000000e+00 : f32
    %104 = vector.broadcast %cst_27 : f32 to vector<8x32xf32>
    %105 = arith.addf %104, %103 : vector<8x32xf32>
    %106 = arith.divf %104, %105 : vector<8x32xf32>
    %107 = vector.extract_strided_slice %100 {offsets = [0, 32], sizes = [8, 32], strides = [1, 1]} : vector<8x128xf32> to vector<8x32xf32>
    %108 = arith.negf %107 : vector<8x32xf32>
    %109 = math.exp %108 : vector<8x32xf32>
    %cst_28 = arith.constant 1.000000e+00 : f32
    %110 = vector.broadcast %cst_28 : f32 to vector<8x32xf32>
    %111 = arith.addf %110, %109 : vector<8x32xf32>
    %112 = arith.divf %110, %111 : vector<8x32xf32>
    %113 = vector.extract_strided_slice %100 {offsets = [0, 64], sizes = [8, 32], strides = [1, 1]} : vector<8x128xf32> to vector<8x32xf32>
    %114 = math.tanh %113 : vector<8x32xf32>
    %115 = vector.extract_strided_slice %100 {offsets = [0, 96], sizes = [8, 32], strides = [1, 1]} : vector<8x128xf32> to vector<8x32xf32>
    %116 = arith.negf %115 : vector<8x32xf32>
    %117 = math.exp %116 : vector<8x32xf32>
    %cst_29 = arith.constant 1.000000e+00 : f32
    %118 = vector.broadcast %cst_29 : f32 to vector<8x32xf32>
    %119 = arith.addf %118, %117 : vector<8x32xf32>
    %120 = arith.divf %118, %119 : vector<8x32xf32>
    %121 = arith.mulf %112, %93 : vector<8x32xf32>
    %122 = arith.mulf %106, %114 : vector<8x32xf32>
    %123 = arith.addf %121, %122 : vector<8x32xf32>
    %124 = math.tanh %123 : vector<8x32xf32>
    %125 = arith.mulf %120, %124 : vector<8x32xf32>
    %c4_i32 = arith.constant 4 : i32
    %126 = arith.index_cast %c4_i32 : i32 to index
    %c0_30 = arith.constant 0 : index
    %c0_31 = arith.constant 0 : index
    %127 = vector.load %arg2[%126, %c0_30, %c0_31] : memref<8x8x128xf32, #tpu.memory_space<vmem>>, vector<1x8x128xf32>
    %128 = vector.shape_cast %127 : vector<1x8x128xf32> to vector<8x128xf32>
    %cst_32 = arith.constant dense<0.000000e+00> : vector<8x128xf32>
    %129 = tpu.matmul %125, %3, %cst_32 {dimension_numbers = #tpu.dot_dimension_numbers<[1], [0], [0], [1], [0, 0, 1, 1], [], []>} : vector<8x32xf32>, vector<32x128xf32>, vector<8x128xf32> -> vector<8x128xf32>
    %130 = arith.addf %128, %129 : vector<8x128xf32>
    %131 = vector.extract_strided_slice %130 {offsets = [0, 0], sizes = [8, 32], strides = [1, 1]} : vector<8x128xf32> to vector<8x32xf32>
    %132 = arith.negf %131 : vector<8x32xf32>
    %133 = math.exp %132 : vector<8x32xf32>
    %cst_33 = arith.constant 1.000000e+00 : f32
    %134 = vector.broadcast %cst_33 : f32 to vector<8x32xf32>
    %135 = arith.addf %134, %133 : vector<8x32xf32>
    %136 = arith.divf %134, %135 : vector<8x32xf32>
    %137 = vector.extract_strided_slice %130 {offsets = [0, 32], sizes = [8, 32], strides = [1, 1]} : vector<8x128xf32> to vector<8x32xf32>
    %138 = arith.negf %137 : vector<8x32xf32>
    %139 = math.exp %138 : vector<8x32xf32>
    %cst_34 = arith.constant 1.000000e+00 : f32
    %140 = vector.broadcast %cst_34 : f32 to vector<8x32xf32>
    %141 = arith.addf %140, %139 : vector<8x32xf32>
    %142 = arith.divf %140, %141 : vector<8x32xf32>
    %143 = vector.extract_strided_slice %130 {offsets = [0, 64], sizes = [8, 32], strides = [1, 1]} : vector<8x128xf32> to vector<8x32xf32>
    %144 = math.tanh %143 : vector<8x32xf32>
    %145 = vector.extract_strided_slice %130 {offsets = [0, 96], sizes = [8, 32], strides = [1, 1]} : vector<8x128xf32> to vector<8x32xf32>
    %146 = arith.negf %145 : vector<8x32xf32>
    %147 = math.exp %146 : vector<8x32xf32>
    %cst_35 = arith.constant 1.000000e+00 : f32
    %148 = vector.broadcast %cst_35 : f32 to vector<8x32xf32>
    %149 = arith.addf %148, %147 : vector<8x32xf32>
    %150 = arith.divf %148, %149 : vector<8x32xf32>
    %151 = arith.mulf %142, %123 : vector<8x32xf32>
    %152 = arith.mulf %136, %144 : vector<8x32xf32>
    %153 = arith.addf %151, %152 : vector<8x32xf32>
    %154 = math.tanh %153 : vector<8x32xf32>
    %155 = arith.mulf %150, %154 : vector<8x32xf32>
    %c5_i32 = arith.constant 5 : i32
    %156 = arith.index_cast %c5_i32 : i32 to index
    %c0_36 = arith.constant 0 : index
    %c0_37 = arith.constant 0 : index
    %157 = vector.load %arg2[%156, %c0_36, %c0_37] : memref<8x8x128xf32, #tpu.memory_space<vmem>>, vector<1x8x128xf32>
    %158 = vector.shape_cast %157 : vector<1x8x128xf32> to vector<8x128xf32>
    %cst_38 = arith.constant dense<0.000000e+00> : vector<8x128xf32>
    %159 = tpu.matmul %155, %3, %cst_38 {dimension_numbers = #tpu.dot_dimension_numbers<[1], [0], [0], [1], [0, 0, 1, 1], [], []>} : vector<8x32xf32>, vector<32x128xf32>, vector<8x128xf32> -> vector<8x128xf32>
    %160 = arith.addf %158, %159 : vector<8x128xf32>
    %161 = vector.extract_strided_slice %160 {offsets = [0, 0], sizes = [8, 32], strides = [1, 1]} : vector<8x128xf32> to vector<8x32xf32>
    %162 = arith.negf %161 : vector<8x32xf32>
    %163 = math.exp %162 : vector<8x32xf32>
    %cst_39 = arith.constant 1.000000e+00 : f32
    %164 = vector.broadcast %cst_39 : f32 to vector<8x32xf32>
    %165 = arith.addf %164, %163 : vector<8x32xf32>
    %166 = arith.divf %164, %165 : vector<8x32xf32>
    %167 = vector.extract_strided_slice %160 {offsets = [0, 32], sizes = [8, 32], strides = [1, 1]} : vector<8x128xf32> to vector<8x32xf32>
    %168 = arith.negf %167 : vector<8x32xf32>
    %169 = math.exp %168 : vector<8x32xf32>
    %cst_40 = arith.constant 1.000000e+00 : f32
    %170 = vector.broadcast %cst_40 : f32 to vector<8x32xf32>
    %171 = arith.addf %170, %169 : vector<8x32xf32>
    %172 = arith.divf %170, %171 : vector<8x32xf32>
    %173 = vector.extract_strided_slice %160 {offsets = [0, 64], sizes = [8, 32], strides = [1, 1]} : vector<8x128xf32> to vector<8x32xf32>
    %174 = math.tanh %173 : vector<8x32xf32>
    %175 = vector.extract_strided_slice %160 {offsets = [0, 96], sizes = [8, 32], strides = [1, 1]} : vector<8x128xf32> to vector<8x32xf32>
    %176 = arith.negf %175 : vector<8x32xf32>
    %177 = math.exp %176 : vector<8x32xf32>
    %cst_41 = arith.constant 1.000000e+00 : f32
    %178 = vector.broadcast %cst_41 : f32 to vector<8x32xf32>
    %179 = arith.addf %178, %177 : vector<8x32xf32>
    %180 = arith.divf %178, %179 : vector<8x32xf32>
    %181 = arith.mulf %172, %153 : vector<8x32xf32>
    %182 = arith.mulf %166, %174 : vector<8x32xf32>
    %183 = arith.addf %181, %182 : vector<8x32xf32>
    %184 = math.tanh %183 : vector<8x32xf32>
    %185 = arith.mulf %180, %184 : vector<8x32xf32>
    %c6_i32 = arith.constant 6 : i32
    %186 = arith.index_cast %c6_i32 : i32 to index
    %c0_42 = arith.constant 0 : index
    %c0_43 = arith.constant 0 : index
    %187 = vector.load %arg2[%186, %c0_42, %c0_43] : memref<8x8x128xf32, #tpu.memory_space<vmem>>, vector<1x8x128xf32>
    %188 = vector.shape_cast %187 : vector<1x8x128xf32> to vector<8x128xf32>
    %cst_44 = arith.constant dense<0.000000e+00> : vector<8x128xf32>
    %189 = tpu.matmul %185, %3, %cst_44 {dimension_numbers = #tpu.dot_dimension_numbers<[1], [0], [0], [1], [0, 0, 1, 1], [], []>} : vector<8x32xf32>, vector<32x128xf32>, vector<8x128xf32> -> vector<8x128xf32>
    %190 = arith.addf %188, %189 : vector<8x128xf32>
    %191 = vector.extract_strided_slice %190 {offsets = [0, 0], sizes = [8, 32], strides = [1, 1]} : vector<8x128xf32> to vector<8x32xf32>
    %192 = arith.negf %191 : vector<8x32xf32>
    %193 = math.exp %192 : vector<8x32xf32>
    %cst_45 = arith.constant 1.000000e+00 : f32
    %194 = vector.broadcast %cst_45 : f32 to vector<8x32xf32>
    %195 = arith.addf %194, %193 : vector<8x32xf32>
    %196 = arith.divf %194, %195 : vector<8x32xf32>
    %197 = vector.extract_strided_slice %190 {offsets = [0, 32], sizes = [8, 32], strides = [1, 1]} : vector<8x128xf32> to vector<8x32xf32>
    %198 = arith.negf %197 : vector<8x32xf32>
    %199 = math.exp %198 : vector<8x32xf32>
    %cst_46 = arith.constant 1.000000e+00 : f32
    %200 = vector.broadcast %cst_46 : f32 to vector<8x32xf32>
    %201 = arith.addf %200, %199 : vector<8x32xf32>
    %202 = arith.divf %200, %201 : vector<8x32xf32>
    %203 = vector.extract_strided_slice %190 {offsets = [0, 64], sizes = [8, 32], strides = [1, 1]} : vector<8x128xf32> to vector<8x32xf32>
    %204 = math.tanh %203 : vector<8x32xf32>
    %205 = vector.extract_strided_slice %190 {offsets = [0, 96], sizes = [8, 32], strides = [1, 1]} : vector<8x128xf32> to vector<8x32xf32>
    %206 = arith.negf %205 : vector<8x32xf32>
    %207 = math.exp %206 : vector<8x32xf32>
    %cst_47 = arith.constant 1.000000e+00 : f32
    %208 = vector.broadcast %cst_47 : f32 to vector<8x32xf32>
    %209 = arith.addf %208, %207 : vector<8x32xf32>
    %210 = arith.divf %208, %209 : vector<8x32xf32>
    %211 = arith.mulf %202, %183 : vector<8x32xf32>
    %212 = arith.mulf %196, %204 : vector<8x32xf32>
    %213 = arith.addf %211, %212 : vector<8x32xf32>
    %214 = math.tanh %213 : vector<8x32xf32>
    %215 = arith.mulf %210, %214 : vector<8x32xf32>
    %c7_i32 = arith.constant 7 : i32
    %216 = arith.index_cast %c7_i32 : i32 to index
    %c0_48 = arith.constant 0 : index
    %c0_49 = arith.constant 0 : index
    %217 = vector.load %arg2[%216, %c0_48, %c0_49] : memref<8x8x128xf32, #tpu.memory_space<vmem>>, vector<1x8x128xf32>
    %218 = vector.shape_cast %217 : vector<1x8x128xf32> to vector<8x128xf32>
    %cst_50 = arith.constant dense<0.000000e+00> : vector<8x128xf32>
    %219 = tpu.matmul %215, %3, %cst_50 {dimension_numbers = #tpu.dot_dimension_numbers<[1], [0], [0], [1], [0, 0, 1, 1], [], []>} : vector<8x32xf32>, vector<32x128xf32>, vector<8x128xf32> -> vector<8x128xf32>
    %220 = arith.addf %218, %219 : vector<8x128xf32>
    %221 = vector.extract_strided_slice %220 {offsets = [0, 0], sizes = [8, 32], strides = [1, 1]} : vector<8x128xf32> to vector<8x32xf32>
    %222 = arith.negf %221 : vector<8x32xf32>
    %223 = math.exp %222 : vector<8x32xf32>
    %cst_51 = arith.constant 1.000000e+00 : f32
    %224 = vector.broadcast %cst_51 : f32 to vector<8x32xf32>
    %225 = arith.addf %224, %223 : vector<8x32xf32>
    %226 = arith.divf %224, %225 : vector<8x32xf32>
    %227 = vector.extract_strided_slice %220 {offsets = [0, 32], sizes = [8, 32], strides = [1, 1]} : vector<8x128xf32> to vector<8x32xf32>
    %228 = arith.negf %227 : vector<8x32xf32>
    %229 = math.exp %228 : vector<8x32xf32>
    %cst_52 = arith.constant 1.000000e+00 : f32
    %230 = vector.broadcast %cst_52 : f32 to vector<8x32xf32>
    %231 = arith.addf %230, %229 : vector<8x32xf32>
    %232 = arith.divf %230, %231 : vector<8x32xf32>
    %233 = vector.extract_strided_slice %220 {offsets = [0, 64], sizes = [8, 32], strides = [1, 1]} : vector<8x128xf32> to vector<8x32xf32>
    %234 = math.tanh %233 : vector<8x32xf32>
    %235 = vector.extract_strided_slice %220 {offsets = [0, 96], sizes = [8, 32], strides = [1, 1]} : vector<8x128xf32> to vector<8x32xf32>
    %236 = arith.negf %235 : vector<8x32xf32>
    %237 = math.exp %236 : vector<8x32xf32>
    %cst_53 = arith.constant 1.000000e+00 : f32
    %238 = vector.broadcast %cst_53 : f32 to vector<8x32xf32>
    %239 = arith.addf %238, %237 : vector<8x32xf32>
    %240 = arith.divf %238, %239 : vector<8x32xf32>
    %241 = arith.mulf %232, %213 : vector<8x32xf32>
    %242 = arith.mulf %226, %234 : vector<8x32xf32>
    %243 = arith.addf %241, %242 : vector<8x32xf32>
    %244 = math.tanh %243 : vector<8x32xf32>
    %245 = arith.mulf %240, %244 : vector<8x32xf32>
    %c8_i32 = arith.constant 8 : i32
    %c0_54 = arith.constant 0 : index
    %c0_55 = arith.constant 0 : index
    %246 = vector.load %arg7[%c0_54, %c0_55] : memref<8x32xf32, #tpu.memory_space<vmem>>, vector<8x32xf32>
    tpu.vector_store %arg7[%c0_54, %c0_55], %245 {strides = array<i32>} : memref<8x32xf32, #tpu.memory_space<vmem>>, vector<8x32xf32>,
    %c0_56 = arith.constant 0 : index
    %c0_57 = arith.constant 0 : index
    %247 = vector.load %arg8[%c0_56, %c0_57] : memref<8x32xf32, #tpu.memory_space<vmem>>, vector<8x32xf32>
    tpu.vector_store %arg8[%c0_56, %c0_57], %243 {strides = array<i32>} : memref<8x32xf32, #tpu.memory_space<vmem>>, vector<8x32xf32>,
    %c0_i32_58 = arith.constant 0 : i32
    %248 = arith.cmpi eq, %arg1, %c0_i32_58 : i32
    %249 = arith.extui %248 : i1 to i32
    %c0_i32_59 = arith.constant 0 : i32
    %250 = arith.cmpi ne, %249, %c0_i32_59 : i32
    scf.if %250 {
      %c0_60 = arith.constant 0 : index
      %c0_61 = arith.constant 0 : index
      %251 = vector.load %arg4[%c0_60, %c0_61] : memref<32x256xf32, #tpu.memory_space<vmem>>, vector<32x256xf32>
      %cst_62 = arith.constant dense<0.000000e+00> : vector<8x256xf32>
      %252 = tpu.matmul %245, %251, %cst_62 {dimension_numbers = #tpu.dot_dimension_numbers<[1], [0], [0], [1], [0, 0, 1, 1], [], []>} : vector<8x32xf32>, vector<32x256xf32>, vector<8x256xf32> -> vector<8x256xf32>
      %c0_63 = arith.constant 0 : index
      %c0_64 = arith.constant 0 : index
      %253 = vector.load %arg5[%c0_63, %c0_64] : memref<1x256xf32, #tpu.memory_space<vmem>>, vector<1x256xf32>
      %254 = vector.broadcast %253 : vector<1x256xf32> to vector<8x256xf32>
      %255 = arith.addf %252, %254 : vector<8x256xf32>
      %cst_65 = arith.constant 0.000000e+00 : f32
      %256 = vector.broadcast %cst_65 : f32 to vector<8x256xf32>
      %257 = arith.maximumf %255, %256 : vector<8x256xf32>
      %c0_66 = arith.constant 0 : index
      %c0_67 = arith.constant 0 : index
      %258 = vector.load %arg6[%c0_66, %c0_67] : memref<8x256xf32, #tpu.memory_space<vmem>>, vector<8x256xf32>
      tpu.vector_store %arg6[%c0_66, %c0_67], %257 {strides = array<i32>} : memref<8x256xf32, #tpu.memory_space<vmem>>, vector<8x256xf32>,
    } else {
    }
    return
  }
  func.func @transform_0(%arg0: i32, %arg1: i32) -> (i32, i32, i32) {
    %c0_i32 = arith.constant 0 : i32
    %c0_i32_0 = arith.constant 0 : i32
    return %arg1, %arg0, %c0_i32 : i32, i32, i32
  }
  func.func @transform_1(%arg0: i32, %arg1: i32) -> (i32, i32) {
    %c0_i32 = arith.constant 0 : i32
    %c0_i32_0 = arith.constant 0 : i32
    %c0_i32_1 = arith.constant 0 : i32
    return %c0_i32, %c0_i32_0 : i32, i32
  }
  func.func @transform_2(%arg0: i32, %arg1: i32) -> (i32, i32) {
    %c0_i32 = arith.constant 0 : i32
    %c0_i32_0 = arith.constant 0 : i32
    %c0_i32_1 = arith.constant 0 : i32
    return %c0_i32, %c0_i32_0 : i32, i32
  }
  func.func @transform_3(%arg0: i32, %arg1: i32) -> (i32, i32) {
    %c0_i32 = arith.constant 0 : i32
    %c0_i32_0 = arith.constant 0 : i32
    %c0_i32_1 = arith.constant 0 : i32
    return %c0_i32, %c0_i32_0 : i32, i32
  }
  func.func @transform_4(%arg0: i32, %arg1: i32) -> (i32, i32) {
    %c0_i32 = arith.constant 0 : i32
    %c0_i32_0 = arith.constant 0 : i32
    return %arg0, %c0_i32 : i32, i32
  }
}

module attributes {stable_mosaic.version = 11 : i64} {
  func.func @lstm_fc_kernel(%arg0: i32, %arg1: i32, %arg2: memref<8x8x128xf32, #tpu.memory_space<vmem>>, %arg3: memref<32x128xf32, #tpu.memory_space<vmem>>, %arg4: memref<32x256xf32, #tpu.memory_space<vmem>>, %arg5: memref<1x256xf32, #tpu.memory_space<vmem>>, %arg6: memref<8x256xf32, #tpu.memory_space<vmem>>, %arg7: memref<8x32xf32, #tpu.memory_space<vmem>>, %arg8: memref<8x32xf32, #tpu.memory_space<vmem>>) attributes {dimension_semantics = [#tpu.dimension_semantics<parallel>, #tpu.dimension_semantics<arbitrary>], iteration_bounds = array<i64: 1, 1>, scalar_prefetch = 0 : i64, scratch_operands = 2 : i64, tpu.core_type = #tpu.core_type<tc>, window_params = [{transform_indices = @transform_0, window_bounds = array<i64: 8, 8, 128>}, {pipeline_mode = #tpu.pipeline_mode<synchronous>, transform_indices = @transform_1, window_bounds = array<i64: 32, 128>}, {pipeline_mode = #tpu.pipeline_mode<synchronous>, transform_indices = @transform_2, window_bounds = array<i64: 32, 256>}, {pipeline_mode = #tpu.pipeline_mode<synchronous>, transform_indices = @transform_3, window_bounds = array<i64: 1, 256>}, {transform_indices = @transform_4, window_bounds = array<i64: 8, 256>}]} {
    %c0_i32 = arith.constant 0 : i32
    %0 = arith.cmpi eq, %arg1, %c0_i32 : i32
    %1 = arith.extui %0 : i1 to i32
    %c0_i32_0 = arith.constant 0 : i32
    %2 = arith.cmpi ne, %1, %c0_i32_0 : i32
    scf.if %2 {
      %cst_60 = arith.constant 0.000000e+00 : f32
      %251 = vector.broadcast %cst_60 : f32 to vector<8x32xf32>
      %c0_61 = arith.constant 0 : index
      %c0_62 = arith.constant 0 : index
      %252 = vector.load %arg7[%c0_61, %c0_62] : memref<8x32xf32, #tpu.memory_space<vmem>>, vector<8x32xf32>
      tpu.vector_store %arg7[%c0_61, %c0_62], %251 {strides = array<i32>} : memref<8x32xf32, #tpu.memory_space<vmem>>, vector<8x32xf32>,
      %cst_63 = arith.constant 0.000000e+00 : f32
      %253 = vector.broadcast %cst_63 : f32 to vector<8x32xf32>
      %c0_64 = arith.constant 0 : index
      %c0_65 = arith.constant 0 : index
      %254 = vector.load %arg8[%c0_64, %c0_65] : memref<8x32xf32, #tpu.memory_space<vmem>>, vector<8x32xf32>
      tpu.vector_store %arg8[%c0_64, %c0_65], %253 {strides = array<i32>} : memref<8x32xf32, #tpu.memory_space<vmem>>, vector<8x32xf32>,
    } else {
    }
    %c0 = arith.constant 0 : index
    %c0_1 = arith.constant 0 : index
    %3 = vector.load %arg3[%c0, %c0_1] : memref<32x128xf32, #tpu.memory_space<vmem>>, vector<32x128xf32>
    %c0_2 = arith.constant 0 : index
    %c0_3 = arith.constant 0 : index
    %4 = vector.load %arg7[%c0_2, %c0_3] : memref<8x32xf32, #tpu.memory_space<vmem>>, vector<8x32xf32>
    %c0_4 = arith.constant 0 : index
    %c0_5 = arith.constant 0 : index
    %5 = vector.load %arg8[%c0_4, %c0_5] : memref<8x32xf32, #tpu.memory_space<vmem>>, vector<8x32xf32>
    %c0_i32_6 = arith.constant 0 : i32
    %6 = arith.index_cast %c0_i32_6 : i32 to index
    %c0_7 = arith.constant 0 : index
    %c0_8 = arith.constant 0 : index
    %7 = vector.load %arg2[%6, %c0_7, %c0_8] : memref<8x8x128xf32, #tpu.memory_space<vmem>>, vector<1x8x128xf32>
    %8 = vector.shape_cast %7 : vector<1x8x128xf32> to vector<8x128xf32>
    %cst = arith.constant dense<0.000000e+00> : vector<8x128xf32>
    %9 = tpu.matmul %4, %3, %cst {dimension_numbers = #tpu.dot_dimension_numbers<[1], [0], [0], [1], [0, 0, 1, 1], [], []>} : vector<8x32xf32>, vector<32x128xf32>, vector<8x128xf32> -> vector<8x128xf32>
    %10 = arith.addf %8, %9 : vector<8x128xf32>
    %11 = vector.extract_strided_slice %10 {offsets = [0, 0], sizes = [8, 32], strides = [1, 1]} : vector<8x128xf32> to vector<8x32xf32>
    %12 = arith.negf %11 : vector<8x32xf32>
    %13 = math.exp %12 : vector<8x32xf32>
    %cst_9 = arith.constant 1.000000e+00 : f32
    %14 = vector.broadcast %cst_9 : f32 to vector<8x32xf32>
    %15 = arith.addf %14, %13 : vector<8x32xf32>
    %16 = arith.divf %14, %15 : vector<8x32xf32>
    %17 = vector.extract_strided_slice %10 {offsets = [0, 32], sizes = [8, 32], strides = [1, 1]} : vector<8x128xf32> to vector<8x32xf32>
    %18 = arith.negf %17 : vector<8x32xf32>
    %19 = math.exp %18 : vector<8x32xf32>
    %cst_10 = arith.constant 1.000000e+00 : f32
    %20 = vector.broadcast %cst_10 : f32 to vector<8x32xf32>
    %21 = arith.addf %20, %19 : vector<8x32xf32>
    %22 = arith.divf %20, %21 : vector<8x32xf32>
    %23 = vector.extract_strided_slice %10 {offsets = [0, 64], sizes = [8, 32], strides = [1, 1]} : vector<8x128xf32> to vector<8x32xf32>
    %24 = math.tanh %23 : vector<8x32xf32>
    %25 = vector.extract_strided_slice %10 {offsets = [0, 96], sizes = [8, 32], strides = [1, 1]} : vector<8x128xf32> to vector<8x32xf32>
    %26 = arith.negf %25 : vector<8x32xf32>
    %27 = math.exp %26 : vector<8x32xf32>
    %cst_11 = arith.constant 1.000000e+00 : f32
    %28 = vector.broadcast %cst_11 : f32 to vector<8x32xf32>
    %29 = arith.addf %28, %27 : vector<8x32xf32>
    %30 = arith.divf %28, %29 : vector<8x32xf32>
    %31 = arith.mulf %22, %5 : vector<8x32xf32>
    %32 = arith.mulf %16, %24 : vector<8x32xf32>
    %33 = arith.addf %31, %32 : vector<8x32xf32>
    %34 = math.tanh %33 : vector<8x32xf32>
    %35 = arith.mulf %30, %34 : vector<8x32xf32>
    %c1_i32 = arith.constant 1 : i32
    %36 = arith.index_cast %c1_i32 : i32 to index
    %c0_12 = arith.constant 0 : index
    %c0_13 = arith.constant 0 : index
    %37 = vector.load %arg2[%36, %c0_12, %c0_13] : memref<8x8x128xf32, #tpu.memory_space<vmem>>, vector<1x8x128xf32>
    %38 = vector.shape_cast %37 : vector<1x8x128xf32> to vector<8x128xf32>
    %cst_14 = arith.constant dense<0.000000e+00> : vector<8x128xf32>
    %39 = tpu.matmul %35, %3, %cst_14 {dimension_numbers = #tpu.dot_dimension_numbers<[1], [0], [0], [1], [0, 0, 1, 1], [], []>} : vector<8x32xf32>, vector<32x128xf32>, vector<8x128xf32> -> vector<8x128xf32>
    %40 = arith.addf %38, %39 : vector<8x128xf32>
    %41 = vector.extract_strided_slice %40 {offsets = [0, 0], sizes = [8, 32], strides = [1, 1]} : vector<8x128xf32> to vector<8x32xf32>
    %42 = arith.negf %41 : vector<8x32xf32>
    %43 = math.exp %42 : vector<8x32xf32>
    %cst_15 = arith.constant 1.000000e+00 : f32
    %44 = vector.broadcast %cst_15 : f32 to vector<8x32xf32>
    %45 = arith.addf %44, %43 : vector<8x32xf32>
    %46 = arith.divf %44, %45 : vector<8x32xf32>
    %47 = vector.extract_strided_slice %40 {offsets = [0, 32], sizes = [8, 32], strides = [1, 1]} : vector<8x128xf32> to vector<8x32xf32>
    %48 = arith.negf %47 : vector<8x32xf32>
    %49 = math.exp %48 : vector<8x32xf32>
    %cst_16 = arith.constant 1.000000e+00 : f32
    %50 = vector.broadcast %cst_16 : f32 to vector<8x32xf32>
    %51 = arith.addf %50, %49 : vector<8x32xf32>
    %52 = arith.divf %50, %51 : vector<8x32xf32>
    %53 = vector.extract_strided_slice %40 {offsets = [0, 64], sizes = [8, 32], strides = [1, 1]} : vector<8x128xf32> to vector<8x32xf32>
    %54 = math.tanh %53 : vector<8x32xf32>
    %55 = vector.extract_strided_slice %40 {offsets = [0, 96], sizes = [8, 32], strides = [1, 1]} : vector<8x128xf32> to vector<8x32xf32>
    %56 = arith.negf %55 : vector<8x32xf32>
    %57 = math.exp %56 : vector<8x32xf32>
    %cst_17 = arith.constant 1.000000e+00 : f32
    %58 = vector.broadcast %cst_17 : f32 to vector<8x32xf32>
    %59 = arith.addf %58, %57 : vector<8x32xf32>
    %60 = arith.divf %58, %59 : vector<8x32xf32>
    %61 = arith.mulf %52, %33 : vector<8x32xf32>
    %62 = arith.mulf %46, %54 : vector<8x32xf32>
    %63 = arith.addf %61, %62 : vector<8x32xf32>
    %64 = math.tanh %63 : vector<8x32xf32>
    %65 = arith.mulf %60, %64 : vector<8x32xf32>
    %c2_i32 = arith.constant 2 : i32
    %66 = arith.index_cast %c2_i32 : i32 to index
    %c0_18 = arith.constant 0 : index
    %c0_19 = arith.constant 0 : index
    %67 = vector.load %arg2[%66, %c0_18, %c0_19] : memref<8x8x128xf32, #tpu.memory_space<vmem>>, vector<1x8x128xf32>
    %68 = vector.shape_cast %67 : vector<1x8x128xf32> to vector<8x128xf32>
    %cst_20 = arith.constant dense<0.000000e+00> : vector<8x128xf32>
    %69 = tpu.matmul %65, %3, %cst_20 {dimension_numbers = #tpu.dot_dimension_numbers<[1], [0], [0], [1], [0, 0, 1, 1], [], []>} : vector<8x32xf32>, vector<32x128xf32>, vector<8x128xf32> -> vector<8x128xf32>
    %70 = arith.addf %68, %69 : vector<8x128xf32>
    %71 = vector.extract_strided_slice %70 {offsets = [0, 0], sizes = [8, 32], strides = [1, 1]} : vector<8x128xf32> to vector<8x32xf32>
    %72 = arith.negf %71 : vector<8x32xf32>
    %73 = math.exp %72 : vector<8x32xf32>
    %cst_21 = arith.constant 1.000000e+00 : f32
    %74 = vector.broadcast %cst_21 : f32 to vector<8x32xf32>
    %75 = arith.addf %74, %73 : vector<8x32xf32>
    %76 = arith.divf %74, %75 : vector<8x32xf32>
    %77 = vector.extract_strided_slice %70 {offsets = [0, 32], sizes = [8, 32], strides = [1, 1]} : vector<8x128xf32> to vector<8x32xf32>
    %78 = arith.negf %77 : vector<8x32xf32>
    %79 = math.exp %78 : vector<8x32xf32>
    %cst_22 = arith.constant 1.000000e+00 : f32
    %80 = vector.broadcast %cst_22 : f32 to vector<8x32xf32>
    %81 = arith.addf %80, %79 : vector<8x32xf32>
    %82 = arith.divf %80, %81 : vector<8x32xf32>
    %83 = vector.extract_strided_slice %70 {offsets = [0, 64], sizes = [8, 32], strides = [1, 1]} : vector<8x128xf32> to vector<8x32xf32>
    %84 = math.tanh %83 : vector<8x32xf32>
    %85 = vector.extract_strided_slice %70 {offsets = [0, 96], sizes = [8, 32], strides = [1, 1]} : vector<8x128xf32> to vector<8x32xf32>
    %86 = arith.negf %85 : vector<8x32xf32>
    %87 = math.exp %86 : vector<8x32xf32>
    %cst_23 = arith.constant 1.000000e+00 : f32
    %88 = vector.broadcast %cst_23 : f32 to vector<8x32xf32>
    %89 = arith.addf %88, %87 : vector<8x32xf32>
    %90 = arith.divf %88, %89 : vector<8x32xf32>
    %91 = arith.mulf %82, %63 : vector<8x32xf32>
    %92 = arith.mulf %76, %84 : vector<8x32xf32>
    %93 = arith.addf %91, %92 : vector<8x32xf32>
    %94 = math.tanh %93 : vector<8x32xf32>
    %95 = arith.mulf %90, %94 : vector<8x32xf32>
    %c3_i32 = arith.constant 3 : i32
    %96 = arith.index_cast %c3_i32 : i32 to index
    %c0_24 = arith.constant 0 : index
    %c0_25 = arith.constant 0 : index
    %97 = vector.load %arg2[%96, %c0_24, %c0_25] : memref<8x8x128xf32, #tpu.memory_space<vmem>>, vector<1x8x128xf32>
    %98 = vector.shape_cast %97 : vector<1x8x128xf32> to vector<8x128xf32>
    %cst_26 = arith.constant dense<0.000000e+00> : vector<8x128xf32>
    %99 = tpu.matmul %95, %3, %cst_26 {dimension_numbers = #tpu.dot_dimension_numbers<[1], [0], [0], [1], [0, 0, 1, 1], [], []>} : vector<8x32xf32>, vector<32x128xf32>, vector<8x128xf32> -> vector<8x128xf32>
    %100 = arith.addf %98, %99 : vector<8x128xf32>
    %101 = vector.extract_strided_slice %100 {offsets = [0, 0], sizes = [8, 32], strides = [1, 1]} : vector<8x128xf32> to vector<8x32xf32>
    %102 = arith.negf %101 : vector<8x32xf32>
    %103 = math.exp %102 : vector<8x32xf32>
    %cst_27 = arith.constant 1.000000e+00 : f32
    %104 = vector.broadcast %cst_27 : f32 to vector<8x32xf32>
    %105 = arith.addf %104, %103 : vector<8x32xf32>
    %106 = arith.divf %104, %105 : vector<8x32xf32>
    %107 = vector.extract_strided_slice %100 {offsets = [0, 32], sizes = [8, 32], strides = [1, 1]} : vector<8x128xf32> to vector<8x32xf32>
    %108 = arith.negf %107 : vector<8x32xf32>
    %109 = math.exp %108 : vector<8x32xf32>
    %cst_28 = arith.constant 1.000000e+00 : f32
    %110 = vector.broadcast %cst_28 : f32 to vector<8x32xf32>
    %111 = arith.addf %110, %109 : vector<8x32xf32>
    %112 = arith.divf %110, %111 : vector<8x32xf32>
    %113 = vector.extract_strided_slice %100 {offsets = [0, 64], sizes = [8, 32], strides = [1, 1]} : vector<8x128xf32> to vector<8x32xf32>
    %114 = math.tanh %113 : vector<8x32xf32>
    %115 = vector.extract_strided_slice %100 {offsets = [0, 96], sizes = [8, 32], strides = [1, 1]} : vector<8x128xf32> to vector<8x32xf32>
    %116 = arith.negf %115 : vector<8x32xf32>
    %117 = math.exp %116 : vector<8x32xf32>
    %cst_29 = arith.constant 1.000000e+00 : f32
    %118 = vector.broadcast %cst_29 : f32 to vector<8x32xf32>
    %119 = arith.addf %118, %117 : vector<8x32xf32>
    %120 = arith.divf %118, %119 : vector<8x32xf32>
    %121 = arith.mulf %112, %93 : vector<8x32xf32>
    %122 = arith.mulf %106, %114 : vector<8x32xf32>
    %123 = arith.addf %121, %122 : vector<8x32xf32>
    %124 = math.tanh %123 : vector<8x32xf32>
    %125 = arith.mulf %120, %124 : vector<8x32xf32>
    %c4_i32 = arith.constant 4 : i32
    %126 = arith.index_cast %c4_i32 : i32 to index
    %c0_30 = arith.constant 0 : index
    %c0_31 = arith.constant 0 : index
    %127 = vector.load %arg2[%126, %c0_30, %c0_31] : memref<8x8x128xf32, #tpu.memory_space<vmem>>, vector<1x8x128xf32>
    %128 = vector.shape_cast %127 : vector<1x8x128xf32> to vector<8x128xf32>
    %cst_32 = arith.constant dense<0.000000e+00> : vector<8x128xf32>
    %129 = tpu.matmul %125, %3, %cst_32 {dimension_numbers = #tpu.dot_dimension_numbers<[1], [0], [0], [1], [0, 0, 1, 1], [], []>} : vector<8x32xf32>, vector<32x128xf32>, vector<8x128xf32> -> vector<8x128xf32>
    %130 = arith.addf %128, %129 : vector<8x128xf32>
    %131 = vector.extract_strided_slice %130 {offsets = [0, 0], sizes = [8, 32], strides = [1, 1]} : vector<8x128xf32> to vector<8x32xf32>
    %132 = arith.negf %131 : vector<8x32xf32>
    %133 = math.exp %132 : vector<8x32xf32>
    %cst_33 = arith.constant 1.000000e+00 : f32
    %134 = vector.broadcast %cst_33 : f32 to vector<8x32xf32>
    %135 = arith.addf %134, %133 : vector<8x32xf32>
    %136 = arith.divf %134, %135 : vector<8x32xf32>
    %137 = vector.extract_strided_slice %130 {offsets = [0, 32], sizes = [8, 32], strides = [1, 1]} : vector<8x128xf32> to vector<8x32xf32>
    %138 = arith.negf %137 : vector<8x32xf32>
    %139 = math.exp %138 : vector<8x32xf32>
    %cst_34 = arith.constant 1.000000e+00 : f32
    %140 = vector.broadcast %cst_34 : f32 to vector<8x32xf32>
    %141 = arith.addf %140, %139 : vector<8x32xf32>
    %142 = arith.divf %140, %141 : vector<8x32xf32>
    %143 = vector.extract_strided_slice %130 {offsets = [0, 64], sizes = [8, 32], strides = [1, 1]} : vector<8x128xf32> to vector<8x32xf32>
    %144 = math.tanh %143 : vector<8x32xf32>
    %145 = vector.extract_strided_slice %130 {offsets = [0, 96], sizes = [8, 32], strides = [1, 1]} : vector<8x128xf32> to vector<8x32xf32>
    %146 = arith.negf %145 : vector<8x32xf32>
    %147 = math.exp %146 : vector<8x32xf32>
    %cst_35 = arith.constant 1.000000e+00 : f32
    %148 = vector.broadcast %cst_35 : f32 to vector<8x32xf32>
    %149 = arith.addf %148, %147 : vector<8x32xf32>
    %150 = arith.divf %148, %149 : vector<8x32xf32>
    %151 = arith.mulf %142, %123 : vector<8x32xf32>
    %152 = arith.mulf %136, %144 : vector<8x32xf32>
    %153 = arith.addf %151, %152 : vector<8x32xf32>
    %154 = math.tanh %153 : vector<8x32xf32>
    %155 = arith.mulf %150, %154 : vector<8x32xf32>
    %c5_i32 = arith.constant 5 : i32
    %156 = arith.index_cast %c5_i32 : i32 to index
    %c0_36 = arith.constant 0 : index
    %c0_37 = arith.constant 0 : index
    %157 = vector.load %arg2[%156, %c0_36, %c0_37] : memref<8x8x128xf32, #tpu.memory_space<vmem>>, vector<1x8x128xf32>
    %158 = vector.shape_cast %157 : vector<1x8x128xf32> to vector<8x128xf32>
    %cst_38 = arith.constant dense<0.000000e+00> : vector<8x128xf32>
    %159 = tpu.matmul %155, %3, %cst_38 {dimension_numbers = #tpu.dot_dimension_numbers<[1], [0], [0], [1], [0, 0, 1, 1], [], []>} : vector<8x32xf32>, vector<32x128xf32>, vector<8x128xf32> -> vector<8x128xf32>
    %160 = arith.addf %158, %159 : vector<8x128xf32>
    %161 = vector.extract_strided_slice %160 {offsets = [0, 0], sizes = [8, 32], strides = [1, 1]} : vector<8x128xf32> to vector<8x32xf32>
    %162 = arith.negf %161 : vector<8x32xf32>
    %163 = math.exp %162 : vector<8x32xf32>
    %cst_39 = arith.constant 1.000000e+00 : f32
    %164 = vector.broadcast %cst_39 : f32 to vector<8x32xf32>
    %165 = arith.addf %164, %163 : vector<8x32xf32>
    %166 = arith.divf %164, %165 : vector<8x32xf32>
    %167 = vector.extract_strided_slice %160 {offsets = [0, 32], sizes = [8, 32], strides = [1, 1]} : vector<8x128xf32> to vector<8x32xf32>
    %168 = arith.negf %167 : vector<8x32xf32>
    %169 = math.exp %168 : vector<8x32xf32>
    %cst_40 = arith.constant 1.000000e+00 : f32
    %170 = vector.broadcast %cst_40 : f32 to vector<8x32xf32>
    %171 = arith.addf %170, %169 : vector<8x32xf32>
    %172 = arith.divf %170, %171 : vector<8x32xf32>
    %173 = vector.extract_strided_slice %160 {offsets = [0, 64], sizes = [8, 32], strides = [1, 1]} : vector<8x128xf32> to vector<8x32xf32>
    %174 = math.tanh %173 : vector<8x32xf32>
    %175 = vector.extract_strided_slice %160 {offsets = [0, 96], sizes = [8, 32], strides = [1, 1]} : vector<8x128xf32> to vector<8x32xf32>
    %176 = arith.negf %175 : vector<8x32xf32>
    %177 = math.exp %176 : vector<8x32xf32>
    %cst_41 = arith.constant 1.000000e+00 : f32
    %178 = vector.broadcast %cst_41 : f32 to vector<8x32xf32>
    %179 = arith.addf %178, %177 : vector<8x32xf32>
    %180 = arith.divf %178, %179 : vector<8x32xf32>
    %181 = arith.mulf %172, %153 : vector<8x32xf32>
    %182 = arith.mulf %166, %174 : vector<8x32xf32>
    %183 = arith.addf %181, %182 : vector<8x32xf32>
    %184 = math.tanh %183 : vector<8x32xf32>
    %185 = arith.mulf %180, %184 : vector<8x32xf32>
    %c6_i32 = arith.constant 6 : i32
    %186 = arith.index_cast %c6_i32 : i32 to index
    %c0_42 = arith.constant 0 : index
    %c0_43 = arith.constant 0 : index
    %187 = vector.load %arg2[%186, %c0_42, %c0_43] : memref<8x8x128xf32, #tpu.memory_space<vmem>>, vector<1x8x128xf32>
    %188 = vector.shape_cast %187 : vector<1x8x128xf32> to vector<8x128xf32>
    %cst_44 = arith.constant dense<0.000000e+00> : vector<8x128xf32>
    %189 = tpu.matmul %185, %3, %cst_44 {dimension_numbers = #tpu.dot_dimension_numbers<[1], [0], [0], [1], [0, 0, 1, 1], [], []>} : vector<8x32xf32>, vector<32x128xf32>, vector<8x128xf32> -> vector<8x128xf32>
    %190 = arith.addf %188, %189 : vector<8x128xf32>
    %191 = vector.extract_strided_slice %190 {offsets = [0, 0], sizes = [8, 32], strides = [1, 1]} : vector<8x128xf32> to vector<8x32xf32>
    %192 = arith.negf %191 : vector<8x32xf32>
    %193 = math.exp %192 : vector<8x32xf32>
    %cst_45 = arith.constant 1.000000e+00 : f32
    %194 = vector.broadcast %cst_45 : f32 to vector<8x32xf32>
    %195 = arith.addf %194, %193 : vector<8x32xf32>
    %196 = arith.divf %194, %195 : vector<8x32xf32>
    %197 = vector.extract_strided_slice %190 {offsets = [0, 32], sizes = [8, 32], strides = [1, 1]} : vector<8x128xf32> to vector<8x32xf32>
    %198 = arith.negf %197 : vector<8x32xf32>
    %199 = math.exp %198 : vector<8x32xf32>
    %cst_46 = arith.constant 1.000000e+00 : f32
    %200 = vector.broadcast %cst_46 : f32 to vector<8x32xf32>
    %201 = arith.addf %200, %199 : vector<8x32xf32>
    %202 = arith.divf %200, %201 : vector<8x32xf32>
    %203 = vector.extract_strided_slice %190 {offsets = [0, 64], sizes = [8, 32], strides = [1, 1]} : vector<8x128xf32> to vector<8x32xf32>
    %204 = math.tanh %203 : vector<8x32xf32>
    %205 = vector.extract_strided_slice %190 {offsets = [0, 96], sizes = [8, 32], strides = [1, 1]} : vector<8x128xf32> to vector<8x32xf32>
    %206 = arith.negf %205 : vector<8x32xf32>
    %207 = math.exp %206 : vector<8x32xf32>
    %cst_47 = arith.constant 1.000000e+00 : f32
    %208 = vector.broadcast %cst_47 : f32 to vector<8x32xf32>
    %209 = arith.addf %208, %207 : vector<8x32xf32>
    %210 = arith.divf %208, %209 : vector<8x32xf32>
    %211 = arith.mulf %202, %183 : vector<8x32xf32>
    %212 = arith.mulf %196, %204 : vector<8x32xf32>
    %213 = arith.addf %211, %212 : vector<8x32xf32>
    %214 = math.tanh %213 : vector<8x32xf32>
    %215 = arith.mulf %210, %214 : vector<8x32xf32>
    %c7_i32 = arith.constant 7 : i32
    %216 = arith.index_cast %c7_i32 : i32 to index
    %c0_48 = arith.constant 0 : index
    %c0_49 = arith.constant 0 : index
    %217 = vector.load %arg2[%216, %c0_48, %c0_49] : memref<8x8x128xf32, #tpu.memory_space<vmem>>, vector<1x8x128xf32>
    %218 = vector.shape_cast %217 : vector<1x8x128xf32> to vector<8x128xf32>
    %cst_50 = arith.constant dense<0.000000e+00> : vector<8x128xf32>
    %219 = tpu.matmul %215, %3, %cst_50 {dimension_numbers = #tpu.dot_dimension_numbers<[1], [0], [0], [1], [0, 0, 1, 1], [], []>} : vector<8x32xf32>, vector<32x128xf32>, vector<8x128xf32> -> vector<8x128xf32>
    %220 = arith.addf %218, %219 : vector<8x128xf32>
    %221 = vector.extract_strided_slice %220 {offsets = [0, 0], sizes = [8, 32], strides = [1, 1]} : vector<8x128xf32> to vector<8x32xf32>
    %222 = arith.negf %221 : vector<8x32xf32>
    %223 = math.exp %222 : vector<8x32xf32>
    %cst_51 = arith.constant 1.000000e+00 : f32
    %224 = vector.broadcast %cst_51 : f32 to vector<8x32xf32>
    %225 = arith.addf %224, %223 : vector<8x32xf32>
    %226 = arith.divf %224, %225 : vector<8x32xf32>
    %227 = vector.extract_strided_slice %220 {offsets = [0, 32], sizes = [8, 32], strides = [1, 1]} : vector<8x128xf32> to vector<8x32xf32>
    %228 = arith.negf %227 : vector<8x32xf32>
    %229 = math.exp %228 : vector<8x32xf32>
    %cst_52 = arith.constant 1.000000e+00 : f32
    %230 = vector.broadcast %cst_52 : f32 to vector<8x32xf32>
    %231 = arith.addf %230, %229 : vector<8x32xf32>
    %232 = arith.divf %230, %231 : vector<8x32xf32>
    %233 = vector.extract_strided_slice %220 {offsets = [0, 64], sizes = [8, 32], strides = [1, 1]} : vector<8x128xf32> to vector<8x32xf32>
    %234 = math.tanh %233 : vector<8x32xf32>
    %235 = vector.extract_strided_slice %220 {offsets = [0, 96], sizes = [8, 32], strides = [1, 1]} : vector<8x128xf32> to vector<8x32xf32>
    %236 = arith.negf %235 : vector<8x32xf32>
    %237 = math.exp %236 : vector<8x32xf32>
    %cst_53 = arith.constant 1.000000e+00 : f32
    %238 = vector.broadcast %cst_53 : f32 to vector<8x32xf32>
    %239 = arith.addf %238, %237 : vector<8x32xf32>
    %240 = arith.divf %238, %239 : vector<8x32xf32>
    %241 = arith.mulf %232, %213 : vector<8x32xf32>
    %242 = arith.mulf %226, %234 : vector<8x32xf32>
    %243 = arith.addf %241, %242 : vector<8x32xf32>
    %244 = math.tanh %243 : vector<8x32xf32>
    %245 = arith.mulf %240, %244 : vector<8x32xf32>
    %c8_i32 = arith.constant 8 : i32
    %c0_54 = arith.constant 0 : index
    %c0_55 = arith.constant 0 : index
    %246 = vector.load %arg7[%c0_54, %c0_55] : memref<8x32xf32, #tpu.memory_space<vmem>>, vector<8x32xf32>
    tpu.vector_store %arg7[%c0_54, %c0_55], %245 {strides = array<i32>} : memref<8x32xf32, #tpu.memory_space<vmem>>, vector<8x32xf32>,
    %c0_56 = arith.constant 0 : index
    %c0_57 = arith.constant 0 : index
    %247 = vector.load %arg8[%c0_56, %c0_57] : memref<8x32xf32, #tpu.memory_space<vmem>>, vector<8x32xf32>
    tpu.vector_store %arg8[%c0_56, %c0_57], %243 {strides = array<i32>} : memref<8x32xf32, #tpu.memory_space<vmem>>, vector<8x32xf32>,
    %c0_i32_58 = arith.constant 0 : i32
    %248 = arith.cmpi eq, %arg1, %c0_i32_58 : i32
    %249 = arith.extui %248 : i1 to i32
    %c0_i32_59 = arith.constant 0 : i32
    %250 = arith.cmpi ne, %249, %c0_i32_59 : i32
    scf.if %250 {
      %c0_60 = arith.constant 0 : index
      %c0_61 = arith.constant 0 : index
      %251 = vector.load %arg4[%c0_60, %c0_61] : memref<32x256xf32, #tpu.memory_space<vmem>>, vector<32x256xf32>
      %cst_62 = arith.constant dense<0.000000e+00> : vector<8x256xf32>
      %252 = tpu.matmul %245, %251, %cst_62 {dimension_numbers = #tpu.dot_dimension_numbers<[1], [0], [0], [1], [0, 0, 1, 1], [], []>} : vector<8x32xf32>, vector<32x256xf32>, vector<8x256xf32> -> vector<8x256xf32>
      %c0_63 = arith.constant 0 : index
      %c0_64 = arith.constant 0 : index
      %253 = vector.load %arg5[%c0_63, %c0_64] : memref<1x256xf32, #tpu.memory_space<vmem>>, vector<1x256xf32>
      %254 = vector.broadcast %253 : vector<1x256xf32> to vector<8x256xf32>
      %255 = arith.addf %252, %254 : vector<8x256xf32>
      %cst_65 = arith.constant 0.000000e+00 : f32
      %256 = vector.broadcast %cst_65 : f32 to vector<8x256xf32>
      %257 = arith.maximumf %255, %256 : vector<8x256xf32>
      %c0_66 = arith.constant 0 : index
      %c0_67 = arith.constant 0 : index
      %258 = vector.load %arg6[%c0_66, %c0_67] : memref<8x256xf32, #tpu.memory_space<vmem>>, vector<8x256xf32>
      tpu.vector_store %arg6[%c0_66, %c0_67], %257 {strides = array<i32>} : memref<8x256xf32, #tpu.memory_space<vmem>>, vector<8x256xf32>,
    } else {
    }
    return
  }
  func.func @transform_0(%arg0: i32, %arg1: i32) -> (i32, i32, i32) {
    %c0_i32 = arith.constant 0 : i32
    %c0_i32_0 = arith.constant 0 : i32
    return %arg1, %arg0, %c0_i32 : i32, i32, i32
  }
  func.func @transform_1(%arg0: i32, %arg1: i32) -> (i32, i32) {
    %c0_i32 = arith.constant 0 : i32
    %c0_i32_0 = arith.constant 0 : i32
    %c0_i32_1 = arith.constant 0 : i32
    return %c0_i32, %c0_i32_0 : i32, i32
  }
  func.func @transform_2(%arg0: i32, %arg1: i32) -> (i32, i32) {
    %c0_i32 = arith.constant 0 : i32
    %c0_i32_0 = arith.constant 0 : i32
    %c0_i32_1 = arith.constant 0 : i32
    return %c0_i32, %c0_i32_0 : i32, i32
  }
  func.func @transform_3(%arg0: i32, %arg1: i32) -> (i32, i32) {
    %c0_i32 = arith.constant 0 : i32
    %c0_i32_0 = arith.constant 0 : i32
    %c0_i32_1 = arith.constant 0 : i32
    return %c0_i32, %c0_i32_0 : i32, i32
  }
  func.func @transform_4(%arg0: i32, %arg1: i32) -> (i32, i32) {
    %c0_i32 = arith.constant 0 : i32
    %c0_i32_0 = arith.constant 0 : i32
    return %arg0, %c0_i32 : i32, i32
  }
}

</mosaic_0001>

<llo_original>
// kernel: tpu_custom_call.1
$region0: #{tpu_custom_call.1}
  #allocation0 [shape = 'u32[]', space=smem, size = 0x4, offset = 0x4, fixed_abs, tag = 'smem constant byte address 0x4 - core index']
  #allocation1 [shape = 'u32[72,128]{1,0:T(1,128)}', space=vmem, size = 0x9000, scoped, tag = 'internal scratch']
  #allocation2 [shape = 'f32[8,32]{1,0:T(8,128)}', space=vmem, size = 0x1000, scoped, tag = 'scratch operand']
  #allocation3 [shape = 'f32[8,32]{1,0:T(8,128)}', space=vmem, size = 0x1000, scoped, tag = 'scratch operand']
  %s0 = inlined_call_operand.hbm [shape: f32[8,8,128], index: 0, kind: input, shape index: {}]
  %s1 = inlined_call_operand.hbm [shape: f32[32,128], index: 1, kind: input, shape index: {}]
  %s2 = inlined_call_operand.hbm [shape: f32[32,256], index: 2, kind: input, shape index: {}]
  %s3 = inlined_call_operand.vmem [shape: f32[1,256], index: 3, kind: input, shape index: {}]
  %s4 = inlined_call_operand.hbm [shape: f32[8,256], index: 4, kind: output, shape index: {}]
  %s5 = sld [smem:[#allocation0]]
  $region46: #{tpu_custom_call.1} parent=0
    _
  %s7 = ssub.s32 1, %s5
  %s8 = scalar_select 0, %s7, %s5
  $region1: #{tpu_custom_call.1} parent=0
    #allocation4 [shape = 'u8[32768]{0}', space=vmem, size = 0x8000, scoped, tag = 'input window, operand 0, single buffered']
    #allocation5 [shape = 's32[1]{0}', space=sflag, size = 0x4, scoped, tag = 'scoped memory for tpu_custom_call.1']
    #allocation6 [shape = 's32[1]{0}', space=sflag, size = 0x4, scoped, tag = 'scoped memory for tpu_custom_call.1']
    #allocation7 [shape = 'u8[16384]{0}', space=vmem, size = 0x4000, scoped, tag = 'input window, operand 1, single buffered']
    #allocation8 [shape = 's32[1]{0}', space=sflag, size = 0x4, scoped, tag = 'scoped memory for tpu_custom_call.1']
    #allocation9 [shape = 'u8[32768]{0}', space=vmem, size = 0x8000, scoped, tag = 'input window, operand 2, single buffered']
    #allocation10 [shape = 'u8[8192]{0}', space=vmem, size = 0x2000, scoped, tag = 'output window, operand 0, single buffered']
    %9 = vsyncpa [#allocation5], 0
    %10 = vsyncpa [#allocation8], 0
    %11 = vsyncpa [#allocation6], 0
    // Predicated region
    $region2: #{tpu_custom_call.1} parent=1 // pred_check
      _
    $region3: #{tpu_custom_call.1} parent=1 // pred_check_branch
      %13 = sbr.rel (0) target = $region5
    $region4: #{tpu_custom_call.1} parent=1 // pred_region
      %15 = vsyncadd [#allocation5], 0
      %s16 = sshll.u32 %s0, 4
      %s17 = int_to_ptr.hbm [resolvable:$true] %s16
      %s18 = sshll.u32 [#allocation4], 4
      %s19 = int_to_ptr.vmem [resolvable:$true] %s18
      %24 = dma.hbm_to_vmem [thread:$0]  %s17, 1024, %s19, [#allocation5], 128, 128, 8
    $region5: #{tpu_custom_call.1} parent=1 // pred_fallthru
      _
    // Predicated region
    $region6: #{tpu_custom_call.1} parent=1 // pred_check
      _
    $region7: #{tpu_custom_call.1} parent=1 // pred_check_branch
      %26 = sbr.rel (0) target = $region9
    $region8: #{tpu_custom_call.1} parent=1 // pred_region
      %28 = vsyncadd [#allocation8], 0
      %s29 = sshll.u32 %s1, 4
      %s30 = int_to_ptr.hbm [resolvable:$true] %s29
      %s31 = sshll.u32 [#allocation7], 4
      %s32 = int_to_ptr.vmem [resolvable:$true] %s31
      %37 = dma.hbm_to_vmem [thread:$0]  %s30, 512, %s32, [#allocation8], 128, 128, 8
    $region9: #{tpu_custom_call.1} parent=1 // pred_fallthru
      _
    // Predicated region
    $region10: #{tpu_custom_call.1} parent=1 // pred_check
      _
    $region11: #{tpu_custom_call.1} parent=1 // pred_check_branch
      %39 = sbr.rel (0) target = $region13
    $region12: #{tpu_custom_call.1} parent=1 // pred_region
      %41 = vsyncadd [#allocation8], 0
      %s42 = sshll.u32 %s2, 4
      %s43 = int_to_ptr.hbm [resolvable:$true] %s42
      %s44 = sshll.u32 [#allocation9], 4
      %s45 = int_to_ptr.vmem [resolvable:$true] %s44
      %50 = dma.hbm_to_vmem [thread:$0]  %s43, 1024, %s45, [#allocation8], 256, 256, 16
    $region13: #{tpu_custom_call.1} parent=1 // pred_fallthru
      _
    // Predicated region
    $region14: #{tpu_custom_call.1} parent=1 // pred_check
      _
    $region15: #{tpu_custom_call.1} parent=1 // pred_check_branch
      %52 = sbr.rel (0) target = $region17
    $region16: #{tpu_custom_call.1} parent=1 // pred_region
      _
    $region17: #{tpu_custom_call.1} parent=1 // pred_fallthru
      _
    // Predicated region
    $region18: #{tpu_custom_call.1} parent=1 // pred_check
      _
    $region19: #{tpu_custom_call.1} parent=1 // pred_check_branch
      %54 = sbr.rel (0) target = $region21
    $region20: #{tpu_custom_call.1} parent=1 // pred_region
      %56 = dma.done [#allocation5], 1024
    $region21: #{tpu_custom_call.1} parent=1 // pred_fallthru
      _
    // Predicated region
    $region22: #{tpu_custom_call.1} parent=1 // pred_check
      _
    $region23: #{tpu_custom_call.1} parent=1 // pred_check_branch
      %58 = sbr.rel (0) target = $region25
    $region24: #{tpu_custom_call.1} parent=1 // pred_region
      %60 = dma.done [#allocation8], 512
    $region25: #{tpu_custom_call.1} parent=1 // pred_fallthru
      _
    // Predicated region
    $region26: #{tpu_custom_call.1} parent=1 // pred_check
      _
    $region27: #{tpu_custom_call.1} parent=1 // pred_check_branch
      %62 = sbr.rel (0) target = $region29
    $region28: #{tpu_custom_call.1} parent=1 // pred_region
      %64 = dma.done [#allocation8], 1024
    $region29: #{tpu_custom_call.1} parent=1 // pred_fallthru
      _
    %p65 = scmp.eq.s32.totalorder 0, 0
    // Predicated region
    $region30: #{tpu_custom_call.1} parent=1 // pred_check
      %p66 = pneg %p65
    $region31: #{tpu_custom_call.1} parent=1 // pred_check_branch
      %68 = sbr.rel (%p66) target = $region33
    $region32: #{tpu_custom_call.1} parent=1 // pred_region
      %vm69 = vcmask 261120
      %70 = vst.msk [vmem:[#allocation2] sm:$0xff] %vm69, 0.0
      %71 = vst.msk [vmem:[#allocation3] sm:$0xff] %vm69, 0.0
    $region33: #{tpu_custom_call.1} parent=1 // pred_fallthru
      _
    %v72 = vld [vmem:[#allocation7] sm:$0xff]
    %v73 = vld [vmem:[#allocation7 + $0x8] sm:$0xff]
    %v74 = vld [vmem:[#allocation7 + $0x10] sm:$0xff]
    %v75 = vld [vmem:[#allocation7 + $0x18] sm:$0xff]
    %v76 = vld [vmem:[#allocation2] sm:$0xff]
    %v77 = vld [vmem:[#allocation3] sm:$0xff]
    %v78 = vld [vmem:[#allocation4] sm:$0xff]
    %vm79 = vcmask 261120
    %v81 = vsel %vm79, %v76, 0
    %83 = vmatpush.msra.mxu0 0.0
    %84 = vmatpush.msra.mxu0 0.0
    %85 = vmatpush.msra.mxu0 0.0
    %86 = vmatpush.msra.mxu0 0.0
    %87 = vmatpush.msra.mxu0 0.0
    %88 = vmatpush.msra.mxu0 0.0
    %89 = vmatpush.msra.mxu0 0.0
    %90 = vmatpush.msra.mxu0 0.0
    %91 = vmatpush.msra.mxu0 0.0
    %92 = vmatpush.msra.mxu0 0.0
    %93 = vmatpush.msra.mxu0 0.0
    %94 = vmatpush.msra.mxu0 0.0
    %95 = vmatpush.msra.mxu0 %v75
    %96 = vmatpush.msra.mxu0 %v74
    %97 = vmatpush.msra.mxu0 %v73
    %98 = vmatpush.msra.mxu0 %v72
    %99 = vmatmul.f32.gmra.mxu0 %v81
    %v100 = vpop.f32.mrf.mxu0
    %v101 = vadd.f32 0.0, %v100
    %102 = vdwg.mxu0
    %v103 = vadd.f32 %v78, %v101
    %v104 = vxor.u32 %v103, 2147483648
    %v105 = vmul.f32 %v104, 1.442695
    %v106 = vpow.pop %v105
    %v107 = vadd.f32 %v106, 1.0
    %v108 = vrcp.pop %v107
    %v109 = vmul.f32 %v107, %v108
    %v110 = vsub.f32 1.0, %v109
    %v111 = vmul.f32 %v108, %v110
    %v112 = vadd.f32 %v108, %v111
    %vm113 = vweird.f32 %v107
    %vm114 = vweird.f32 %v108
    %vm115 = vmor %vm113, %vm114
    %v116 = vsel %vm115, %v108, %v112
    %v117 = vand.u32 2147483647, %v107
    %vm118 = vcmp.eq.f32.partialorder %v117, 8.507059e+37
    %v119 = vand.u32 %v107, 2147483648
    %v120 = vor.u32 1.1754944e-38, %v119
    %v121 = vsel %vm118, %v120, %v116
    %v122 = vmul.f32 1.0, %v121
    %v123 = vtanh.pop %v103
    %125 = vrot.lane.b32.xlu0 %v77, 32
    %v126 = vpop.permute.xlu0 %125
    %v128 = vmul.f32 %v122, %v126
    %130 = vrot.lane.b32.xlu0 %v123, 64
    %v131 = vpop.permute.xlu0 %130
    %v133 = vmul.f32 %v122, %v131
    %135 = vrot.lane.b32.xlu0 %v133, 32
    %v136 = vpop.permute.xlu0 %135
    %v138 = vadd.f32 %v128, %v136
    %v139 = vtanh.pop %v138
    %141 = vrot.lane.b32.xlu0 %v139, 64
    %v142 = vpop.permute.xlu0 %141
    %v144 = vmul.f32 %v122, %v142
    %s145 = scalar_lea.vmem [#allocation4], 8
    %v146 = vld [vmem:[%s145] sm:$0xff]
    %148 = vrot.lane.b32.xlu0 %v144, 32
    %v149 = vpop.permute.xlu0 %148
    %v150 = vsel %vm79, %v149, 0
    %152 = vmatpush.msra.mxu0 0.0
    %153 = vmatpush.msra.mxu0 0.0
    %154 = vmatpush.msra.mxu0 0.0
    %155 = vmatpush.msra.mxu0 0.0
    %156 = vmatpush.msra.mxu0 0.0
    %157 = vmatpush.msra.mxu0 0.0
    %158 = vmatpush.msra.mxu0 0.0
    %159 = vmatpush.msra.mxu0 0.0
    %160 = vmatpush.msra.mxu0 0.0
    %161 = vmatpush.msra.mxu0 0.0
    %162 = vmatpush.msra.mxu0 0.0
    %163 = vmatpush.msra.mxu0 0.0
    %164 = vmatpush.msra.mxu0 %v75
    %165 = vmatpush.msra.mxu0 %v74
    %166 = vmatpush.msra.mxu0 %v73
    %167 = vmatpush.msra.mxu0 %v72
    %168 = vmatmul.f32.gmra.mxu0 %v150
    %v169 = vpop.f32.mrf.mxu0
    %v170 = vadd.f32 0.0, %v169
    %171 = vdwg.mxu0
    %v172 = vadd.f32 %v146, %v170
    %v173 = vxor.u32 %v172, 2147483648
    %v174 = vmul.f32 %v173, 1.442695
    %v175 = vpow.pop %v174
    %v176 = vadd.f32 %v175, 1.0
    %v177 = vrcp.pop %v176
    %v178 = vmul.f32 %v176, %v177
    %v179 = vsub.f32 1.0, %v178
    %v180 = vmul.f32 %v177, %v179
    %v181 = vadd.f32 %v177, %v180
    %vm182 = vweird.f32 %v176
    %vm183 = vweird.f32 %v177
    %vm184 = vmor %vm182, %vm183
    %v185 = vsel %vm184, %v177, %v181
    %v186 = vand.u32 2147483647, %v176
    %vm187 = vcmp.eq.f32.partialorder %v186, 8.507059e+37
    %v188 = vand.u32 %v176, 2147483648
    %v189 = vor.u32 1.1754944e-38, %v188
    %v190 = vsel %vm187, %v189, %v185
    %v191 = vmul.f32 1.0, %v190
    %v192 = vtanh.pop %v172
    %v193 = vmul.f32 %v191, %v138
    %195 = vrot.lane.b32.xlu0 %v192, 64
    %v196 = vpop.permute.xlu0 %195
    %v198 = vmul.f32 %v191, %v196
    %200 = vrot.lane.b32.xlu0 %v198, 32
    %v201 = vpop.permute.xlu0 %200
    %v203 = vadd.f32 %v193, %v201
    %v204 = vtanh.pop %v203
    %206 = vrot.lane.b32.xlu0 %v204, 64
    %v207 = vpop.permute.xlu0 %206
    %v209 = vmul.f32 %v191, %v207
    %s210 = scalar_lea.vmem [#allocation4], 16
    %v211 = vld [vmem:[%s210] sm:$0xff]
    %213 = vrot.lane.b32.xlu0 %v209, 32
    %v214 = vpop.permute.xlu0 %213
    %v215 = vsel %vm79, %v214, 0
    %217 = vmatpush.msra.mxu0 0.0
    %218 = vmatpush.msra.mxu0 0.0
    %219 = vmatpush.msra.mxu0 0.0
    %220 = vmatpush.msra.mxu0 0.0
    %221 = vmatpush.msra.mxu0 0.0
    %222 = vmatpush.msra.mxu0 0.0
    %223 = vmatpush.msra.mxu0 0.0
    %224 = vmatpush.msra.mxu0 0.0
    %225 = vmatpush.msra.mxu0 0.0
    %226 = vmatpush.msra.mxu0 0.0
    %227 = vmatpush.msra.mxu0 0.0
    %228 = vmatpush.msra.mxu0 0.0
    %229 = vmatpush.msra.mxu0 %v75
    %230 = vmatpush.msra.mxu0 %v74
    %231 = vmatpush.msra.mxu0 %v73
    %232 = vmatpush.msra.mxu0 %v72
    %233 = vmatmul.f32.gmra.mxu0 %v215
    %v234 = vpop.f32.mrf.mxu0
    %v235 = vadd.f32 0.0, %v234
    %236 = vdwg.mxu0
    %v237 = vadd.f32 %v211, %v235
    %v238 = vxor.u32 %v237, 2147483648
    %v239 = vmul.f32 %v238, 1.442695
    %v240 = vpow.pop %v239
    %v241 = vadd.f32 %v240, 1.0
    %v242 = vrcp.pop %v241
    %v243 = vmul.f32 %v241, %v242
    %v244 = vsub.f32 1.0, %v243
    %v245 = vmul.f32 %v242, %v244
    %v246 = vadd.f32 %v242, %v245
    %vm247 = vweird.f32 %v241
    %vm248 = vweird.f32 %v242
    %vm249 = vmor %vm247, %vm248
    %v250 = vsel %vm249, %v242, %v246
    %v251 = vand.u32 2147483647, %v241
    %vm252 = vcmp.eq.f32.partialorder %v251, 8.507059e+37
    %v253 = vand.u32 %v241, 2147483648
    %v254 = vor.u32 1.1754944e-38, %v253
    %v255 = vsel %vm252, %v254, %v250
    %v256 = vmul.f32 1.0, %v255
    %v257 = vtanh.pop %v237
    %v258 = vmul.f32 %v256, %v203
    %260 = vrot.lane.b32.xlu0 %v257, 64
    %v261 = vpop.permute.xlu0 %260
    %v263 = vmul.f32 %v256, %v261
    %265 = vrot.lane.b32.xlu0 %v263, 32
    %v266 = vpop.permute.xlu0 %265
    %v268 = vadd.f32 %v258, %v266
    %v269 = vtanh.pop %v268
    %271 = vrot.lane.b32.xlu0 %v269, 64
    %v272 = vpop.permute.xlu0 %271
    %v274 = vmul.f32 %v256, %v272
    %s275 = scalar_lea.vmem [#allocation4], 24
    %v276 = vld [vmem:[%s275] sm:$0xff]
    %278 = vrot.lane.b32.xlu0 %v274, 32
    %v279 = vpop.permute.xlu0 %278
    %v280 = vsel %vm79, %v279, 0
    %282 = vmatpush.msra.mxu0 0.0
    %283 = vmatpush.msra.mxu0 0.0
    %284 = vmatpush.msra.mxu0 0.0
    %285 = vmatpush.msra.mxu0 0.0
    %286 = vmatpush.msra.mxu0 0.0
    %287 = vmatpush.msra.mxu0 0.0
    %288 = vmatpush.msra.mxu0 0.0
    %289 = vmatpush.msra.mxu0 0.0
    %290 = vmatpush.msra.mxu0 0.0
    %291 = vmatpush.msra.mxu0 0.0
    %292 = vmatpush.msra.mxu0 0.0
    %293 = vmatpush.msra.mxu0 0.0
    %294 = vmatpush.msra.mxu0 %v75
    %295 = vmatpush.msra.mxu0 %v74
    %296 = vmatpush.msra.mxu0 %v73
    %297 = vmatpush.msra.mxu0 %v72
    %298 = vmatmul.f32.gmra.mxu0 %v280
    %v299 = vpop.f32.mrf.mxu0
    %v300 = vadd.f32 0.0, %v299
    %301 = vdwg.mxu0
    %v302 = vadd.f32 %v276, %v300
    %v303 = vxor.u32 %v302, 2147483648
    %v304 = vmul.f32 %v303, 1.442695
    %v305 = vpow.pop %v304
    %v306 = vadd.f32 %v305, 1.0
    %v307 = vrcp.pop %v306
    %v308 = vmul.f32 %v306, %v307
    %v309 = vsub.f32 1.0, %v308
    %v310 = vmul.f32 %v307, %v309
    %v311 = vadd.f32 %v307, %v310
    %vm312 = vweird.f32 %v306
    %vm313 = vweird.f32 %v307
    %vm314 = vmor %vm312, %vm313
    %v315 = vsel %vm314, %v307, %v311
    %v316 = vand.u32 2147483647, %v306
    %vm317 = vcmp.eq.f32.partialorder %v316, 8.507059e+37
    %v318 = vand.u32 %v306, 2147483648
    %v319 = vor.u32 1.1754944e-38, %v318
    %v320 = vsel %vm317, %v319, %v315
    %v321 = vmul.f32 1.0, %v320
    %v322 = vtanh.pop %v302
    %v323 = vmul.f32 %v321, %v268
    %325 = vrot.lane.b32.xlu0 %v322, 64
    %v326 = vpop.permute.xlu0 %325
    %v328 = vmul.f32 %v321, %v326
    %330 = vrot.lane.b32.xlu0 %v328, 32
    %v331 = vpop.permute.xlu0 %330
    %v333 = vadd.f32 %v323, %v331
    %v334 = vtanh.pop %v333
    %336 = vrot.lane.b32.xlu0 %v334, 64
    %v337 = vpop.permute.xlu0 %336
    %v339 = vmul.f32 %v321, %v337
    %s340 = scalar_lea.vmem [#allocation4], 32
    %v341 = vld [vmem:[%s340] sm:$0xff]
    %343 = vrot.lane.b32.xlu0 %v339, 32
    %v344 = vpop.permute.xlu0 %343
    %v345 = vsel %vm79, %v344, 0
    %347 = vmatpush.msra.mxu0 0.0
    %348 = vmatpush.msra.mxu0 0.0
    %349 = vmatpush.msra.mxu0 0.0
    %350 = vmatpush.msra.mxu0 0.0
    %351 = vmatpush.msra.mxu0 0.0
    %352 = vmatpush.msra.mxu0 0.0
    %353 = vmatpush.msra.mxu0 0.0
    %354 = vmatpush.msra.mxu0 0.0
    %355 = vmatpush.msra.mxu0 0.0
    %356 = vmatpush.msra.mxu0 0.0
    %357 = vmatpush.msra.mxu0 0.0
    %358 = vmatpush.msra.mxu0 0.0
    %359 = vmatpush.msra.mxu0 %v75
    %360 = vmatpush.msra.mxu0 %v74
    %361 = vmatpush.msra.mxu0 %v73
    %362 = vmatpush.msra.mxu0 %v72
    %363 = vmatmul.f32.gmra.mxu0 %v345
    %v364 = vpop.f32.mrf.mxu0
    %v365 = vadd.f32 0.0, %v364
    %366 = vdwg.mxu0
    %v367 = vadd.f32 %v341, %v365
    %v368 = vxor.u32 %v367, 2147483648
    %v369 = vmul.f32 %v368, 1.442695
    %v370 = vpow.pop %v369
    %v371 = vadd.f32 %v370, 1.0
    %v372 = vrcp.pop %v371
    %v373 = vmul.f32 %v371, %v372
    %v374 = vsub.f32 1.0, %v373
    %v375 = vmul.f32 %v372, %v374
    %v376 = vadd.f32 %v372, %v375
    %vm377 = vweird.f32 %v371
    %vm378 = vweird.f32 %v372
    %vm379 = vmor %vm377, %vm378
    %v380 = vsel %vm379, %v372, %v376
    %v381 = vand.u32 2147483647, %v371
    %vm382 = vcmp.eq.f32.partialorder %v381, 8.507059e+37
    %v383 = vand.u32 %v371, 2147483648
    %v384 = vor.u32 1.1754944e-38, %v383
    %v385 = vsel %vm382, %v384, %v380
    %v386 = vmul.f32 1.0, %v385
    %v387 = vtanh.pop %v367
    %v388 = vmul.f32 %v386, %v333
    %390 = vrot.lane.b32.xlu0 %v387, 64
    %v391 = vpop.permute.xlu0 %390
    %v393 = vmul.f32 %v386, %v391
    %395 = vrot.lane.b32.xlu0 %v393, 32
    %v396 = vpop.permute.xlu0 %395
    %v398 = vadd.f32 %v388, %v396
    %v399 = vtanh.pop %v398
    %401 = vrot.lane.b32.xlu0 %v399, 64
    %v402 = vpop.permute.xlu0 %401
    %v404 = vmul.f32 %v386, %v402
    %s405 = scalar_lea.vmem [#allocation4], 40
    %v406 = vld [vmem:[%s405] sm:$0xff]
    %408 = vrot.lane.b32.xlu0 %v404, 32
    %v409 = vpop.permute.xlu0 %408
    %v410 = vsel %vm79, %v409, 0
    %412 = vmatpush.msra.mxu0 0.0
    %413 = vmatpush.msra.mxu0 0.0
    %414 = vmatpush.msra.mxu0 0.0
    %415 = vmatpush.msra.mxu0 0.0
    %416 = vmatpush.msra.mxu0 0.0
    %417 = vmatpush.msra.mxu0 0.0
    %418 = vmatpush.msra.mxu0 0.0
    %419 = vmatpush.msra.mxu0 0.0
    %420 = vmatpush.msra.mxu0 0.0
    %421 = vmatpush.msra.mxu0 0.0
    %422 = vmatpush.msra.mxu0 0.0
    %423 = vmatpush.msra.mxu0 0.0
    %424 = vmatpush.msra.mxu0 %v75
    %425 = vmatpush.msra.mxu0 %v74
    %426 = vmatpush.msra.mxu0 %v73
    %427 = vmatpush.msra.mxu0 %v72
    %428 = vmatmul.f32.gmra.mxu0 %v410
    %v429 = vpop.f32.mrf.mxu0
    %v430 = vadd.f32 0.0, %v429
    %431 = vdwg.mxu0
    %v432 = vadd.f32 %v406, %v430
    %v433 = vxor.u32 %v432, 2147483648
    %v434 = vmul.f32 %v433, 1.442695
    %v435 = vpow.pop %v434
    %v436 = vadd.f32 %v435, 1.0
    %v437 = vrcp.pop %v436
    %v438 = vmul.f32 %v436, %v437
    %v439 = vsub.f32 1.0, %v438
    %v440 = vmul.f32 %v437, %v439
    %v441 = vadd.f32 %v437, %v440
    %vm442 = vweird.f32 %v436
    %vm443 = vweird.f32 %v437
    %vm444 = vmor %vm442, %vm443
    %v445 = vsel %vm444, %v437, %v441
    %v446 = vand.u32 2147483647, %v436
    %vm447 = vcmp.eq.f32.partialorder %v446, 8.507059e+37
    %v448 = vand.u32 %v436, 2147483648
    %v449 = vor.u32 1.1754944e-38, %v448
    %v450 = vsel %vm447, %v449, %v445
    %v451 = vmul.f32 1.0, %v450
    %v452 = vtanh.pop %v432
    %v453 = vmul.f32 %v451, %v398
    %455 = vrot.lane.b32.xlu0 %v452, 64
    %v456 = vpop.permute.xlu0 %455
    %v458 = vmul.f32 %v451, %v456
    %460 = vrot.lane.b32.xlu0 %v458, 32
    %v461 = vpop.permute.xlu0 %460
    %v463 = vadd.f32 %v453, %v461
    %v464 = vtanh.pop %v463
    %466 = vrot.lane.b32.xlu0 %v464, 64
    %v467 = vpop.permute.xlu0 %466
    %v469 = vmul.f32 %v451, %v467
    %s470 = scalar_lea.vmem [#allocation4], 48
    %v471 = vld [vmem:[%s470] sm:$0xff]
    %473 = vrot.lane.b32.xlu0 %v469, 32
    %v474 = vpop.permute.xlu0 %473
    %v475 = vsel %vm79, %v474, 0
    %477 = vmatpush.msra.mxu0 0.0
    %478 = vmatpush.msra.mxu0 0.0
    %479 = vmatpush.msra.mxu0 0.0
    %480 = vmatpush.msra.mxu0 0.0
    %481 = vmatpush.msra.mxu0 0.0
    %482 = vmatpush.msra.mxu0 0.0
    %483 = vmatpush.msra.mxu0 0.0
    %484 = vmatpush.msra.mxu0 0.0
    %485 = vmatpush.msra.mxu0 0.0
    %486 = vmatpush.msra.mxu0 0.0
    %487 = vmatpush.msra.mxu0 0.0
    %488 = vmatpush.msra.mxu0 0.0
    %489 = vmatpush.msra.mxu0 %v75
    %490 = vmatpush.msra.mxu0 %v74
    %491 = vmatpush.msra.mxu0 %v73
    %492 = vmatpush.msra.mxu0 %v72
    %493 = vmatmul.f32.gmra.mxu0 %v475
    %v494 = vpop.f32.mrf.mxu0
    %v495 = vadd.f32 0.0, %v494
    %496 = vdwg.mxu0
    %v497 = vadd.f32 %v471, %v495
    %v498 = vxor.u32 %v497, 2147483648
    %v499 = vmul.f32 %v498, 1.442695
    %v500 = vpow.pop %v499
    %v501 = vadd.f32 %v500, 1.0
    %v502 = vrcp.pop %v501
    %v503 = vmul.f32 %v501, %v502
    %v504 = vsub.f32 1.0, %v503
    %v505 = vmul.f32 %v502, %v504
    %v506 = vadd.f32 %v502, %v505
    %vm507 = vweird.f32 %v501
    %vm508 = vweird.f32 %v502
    %vm509 = vmor %vm507, %vm508
    %v510 = vsel %vm509, %v502, %v506
    %v511 = vand.u32 2147483647, %v501
    %vm512 = vcmp.eq.f32.partialorder %v511, 8.507059e+37
    %v513 = vand.u32 %v501, 2147483648
    %v514 = vor.u32 1.1754944e-38, %v513
    %v515 = vsel %vm512, %v514, %v510
    %v516 = vmul.f32 1.0, %v515
    %v517 = vtanh.pop %v497
    %v518 = vmul.f32 %v516, %v463
    %520 = vrot.lane.b32.xlu0 %v517, 64
    %v521 = vpop.permute.xlu0 %520
    %v523 = vmul.f32 %v516, %v521
    %525 = vrot.lane.b32.xlu0 %v523, 32
    %v526 = vpop.permute.xlu0 %525
    %v528 = vadd.f32 %v518, %v526
    %v529 = vtanh.pop %v528
    %531 = vrot.lane.b32.xlu0 %v529, 64
    %v532 = vpop.permute.xlu0 %531
    %v534 = vmul.f32 %v516, %v532
    %s535 = scalar_lea.vmem [#allocation4], 56
    %v536 = vld [vmem:[%s535] sm:$0xff]
    %538 = vrot.lane.b32.xlu0 %v534, 32
    %v539 = vpop.permute.xlu0 %538
    %v540 = vsel %vm79, %v539, 0
    %542 = vmatpush.msra.mxu0 0.0
    %543 = vmatpush.msra.mxu0 0.0
    %544 = vmatpush.msra.mxu0 0.0
    %545 = vmatpush.msra.mxu0 0.0
    %546 = vmatpush.msra.mxu0 0.0
    %547 = vmatpush.msra.mxu0 0.0
    %548 = vmatpush.msra.mxu0 0.0
    %549 = vmatpush.msra.mxu0 0.0
    %550 = vmatpush.msra.mxu0 0.0
    %551 = vmatpush.msra.mxu0 0.0
    %552 = vmatpush.msra.mxu0 0.0
    %553 = vmatpush.msra.mxu0 0.0
    %554 = vmatpush.msra.mxu0 %v75
    %555 = vmatpush.msra.mxu0 %v74
    %556 = vmatpush.msra.mxu0 %v73
    %557 = vmatpush.msra.mxu0 %v72
    %558 = vmatmul.f32.gmra.mxu0 %v540
    %v559 = vpop.f32.mrf.mxu0
    %v560 = vadd.f32 0.0, %v559
    %561 = vdwg.mxu0
    %v562 = vadd.f32 %v536, %v560
    %v563 = vxor.u32 %v562, 2147483648
    %v564 = vmul.f32 %v563, 1.442695
    %v565 = vpow.pop %v564
    %v566 = vadd.f32 %v565, 1.0
    %v567 = vrcp.pop %v566
    %v568 = vmul.f32 %v566, %v567
    %v569 = vsub.f32 1.0, %v568
    %v570 = vmul.f32 %v567, %v569
    %v571 = vadd.f32 %v567, %v570
    %vm572 = vweird.f32 %v566
    %vm573 = vweird.f32 %v567
    %vm574 = vmor %vm572, %vm573
    %v575 = vsel %vm574, %v567, %v571
    %v576 = vand.u32 2147483647, %v566
    %vm577 = vcmp.eq.f32.partialorder %v576, 8.507059e+37
    %v578 = vand.u32 %v566, 2147483648
    %v579 = vor.u32 1.1754944e-38, %v578
    %v580 = vsel %vm577, %v579, %v575
    %v581 = vmul.f32 1.0, %v580
    %v582 = vtanh.pop %v562
    %v583 = vmul.f32 %v581, %v528
    %585 = vrot.lane.b32.xlu0 %v582, 64
    %v586 = vpop.permute.xlu0 %585
    %v588 = vmul.f32 %v581, %v586
    %590 = vrot.lane.b32.xlu0 %v588, 32
    %v591 = vpop.permute.xlu0 %590
    %v593 = vadd.f32 %v583, %v591
    %v594 = vtanh.pop %v593
    %596 = vrot.lane.b32.xlu0 %v594, 64
    %v597 = vpop.permute.xlu0 %596
    %v599 = vmul.f32 %v581, %v597
    %601 = vrot.lane.b32.xlu0 %v599, 32
    %v602 = vpop.permute.xlu0 %601
    %604 = vst.msk [vmem:[#allocation2] sm:$0xff] %vm79, %v602
    %606 = vrot.lane.b32.xlu0 %v593, 96
    %v607 = vpop.permute.xlu0 %606
    %609 = vst.msk [vmem:[#allocation3] sm:$0xff] %vm79, %v607
    // Predicated region
    $region34: #{tpu_custom_call.1} parent=1 // pred_check
      %p610 = pneg %p65
    $region35: #{tpu_custom_call.1} parent=1 // pred_check_branch
      %612 = sbr.rel (%p610) target = $region37
    $region36: #{tpu_custom_call.1} parent=1 // pred_region
      %v613 = vld [vmem:[#allocation9] sm:$0xff]
      %v614 = vld [vmem:[#allocation9 + $0x8] sm:$0xff]
      %v615 = vld [vmem:[#allocation9 + $0x10] sm:$0xff]
      %v616 = vld [vmem:[#allocation9 + $0x18] sm:$0xff]
      %v617 = vld [vmem:[#allocation9 + $0x20] sm:$0xff]
      %v618 = vld [vmem:[#allocation9 + $0x28] sm:$0xff]
      %v619 = vld [vmem:[#allocation9 + $0x30] sm:$0xff]
      %v620 = vld [vmem:[#allocation9 + $0x38] sm:$0xff]
      %v621 = vld [vmem:[%s3] sm:$0x3]
      %v623 = vperm.slane %v621, 0
      %v624 = vperm.slane %v621, 1
      %v627 = vsel %vm79, %v602, 0
      %629 = vmatpush.msra.mxu0 0.0
      %630 = vmatpush.msra.mxu0 0.0
      %631 = vmatpush.msra.mxu0 0.0
      %632 = vmatpush.msra.mxu0 0.0
      %633 = vmatpush.msra.mxu0 0.0
      %634 = vmatpush.msra.mxu0 0.0
      %635 = vmatpush.msra.mxu0 0.0
      %636 = vmatpush.msra.mxu0 0.0
      %637 = vmatpush.msra.mxu0 0.0
      %638 = vmatpush.msra.mxu0 0.0
      %639 = vmatpush.msra.mxu0 0.0
      %640 = vmatpush.msra.mxu0 0.0
      %641 = vmatpush.msra.mxu0 %v619
      %642 = vmatpush.msra.mxu0 %v617
      %643 = vmatpush.msra.mxu0 %v615
      %644 = vmatpush.msra.mxu0 %v613
      %645 = vmatmul.f32.gmra.mxu0 %v627
      %v646 = vpop.f32.mrf.mxu0
      %v647 = vadd.f32 %v623, %v646
      %648 = vdwg.mxu0
      %649 = vmatpush.msra.mxu0 0.0
      %650 = vmatpush.msra.mxu0 0.0
      %651 = vmatpush.msra.mxu0 0.0
      %652 = vmatpush.msra.mxu0 0.0
      %653 = vmatpush.msra.mxu0 0.0
      %654 = vmatpush.msra.mxu0 0.0
      %655 = vmatpush.msra.mxu0 0.0
      %656 = vmatpush.msra.mxu0 0.0
      %657 = vmatpush.msra.mxu0 0.0
      %658 = vmatpush.msra.mxu0 0.0
      %659 = vmatpush.msra.mxu0 0.0
      %660 = vmatpush.msra.mxu0 0.0
      %661 = vmatpush.msra.mxu0 %v620
      %662 = vmatpush.msra.mxu0 %v618
      %663 = vmatpush.msra.mxu0 %v616
      %664 = vmatpush.msra.mxu0 %v614
      %665 = vmatmul.f32.gmra.mxu0 %v627
      %v666 = vpop.f32.mrf.mxu0
      %v667 = vadd.f32 %v624, %v666
      %668 = vdwg.mxu0
      %v669 = vmax.f32 %v647, 0.0
      %v670 = vmax.f32 %v667, 0.0
      %671 = vst [vmem:[#allocation10] sm:$0xff] %v669
      %672 = vst [vmem:[#allocation10 + $0x8] sm:$0xff] %v670
    $region37: #{tpu_custom_call.1} parent=1 // pred_fallthru
      _
    // Predicated region
    $region38: #{tpu_custom_call.1} parent=1 // pred_check
      _
    $region39: #{tpu_custom_call.1} parent=1 // pred_check_branch
      %674 = sbr.rel (0) target = $region41
    $region40: #{tpu_custom_call.1} parent=1 // pred_region
      %676 = vsyncadd [#allocation6], 0
      %s678 = sshll.u32 [#allocation10], 4
      %s679 = int_to_ptr.vmem [resolvable:$true] %s678
      %s680 = sshll.u32 %s4, 4
      %s681 = int_to_ptr.hbm [resolvable:$true] %s680
      %683 = dma.vmem_to_hbm [thread:$0]  %s679, 256, %s681, [#allocation6]
    $region41: #{tpu_custom_call.1} parent=1 // pred_fallthru
      _
    // Predicated region
    $region42: #{tpu_custom_call.1} parent=1 // pred_check
      _
    $region43: #{tpu_custom_call.1} parent=1 // pred_check_branch
      %685 = sbr.rel (0) target = $region45
    $region44: #{tpu_custom_call.1} parent=1 // pred_region
      %687 = dma.done [#allocation6], 256
    $region45: #{tpu_custom_call.1} parent=1 // pred_fallthru
      _
    %688 = vsyncpa [#allocation5], 1
    %689 = vsyncpa [#allocation8], 1
    %690 = vsyncpa [#allocation6], 1

// kernel: tpu_custom_call.1
$region0: #{tpu_custom_call.1}
  #allocation0 [shape = 'u32[]', space=smem, size = 0x4, offset = 0x4, fixed_abs, tag = 'smem constant byte address 0x4 - core index']
  #allocation1 [shape = 'u32[72,128]{1,0:T(1,128)}', space=vmem, size = 0x9000, scoped, tag = 'internal scratch']
  #allocation2 [shape = 'f32[8,32]{1,0:T(8,128)}', space=vmem, size = 0x1000, scoped, tag = 'scratch operand']
  #allocation3 [shape = 'f32[8,32]{1,0:T(8,128)}', space=vmem, size = 0x1000, scoped, tag = 'scratch operand']
  %s0 = inlined_call_operand.hbm [shape: f32[8,8,128], index: 0, kind: input, shape index: {}]
  %s1 = inlined_call_operand.hbm [shape: f32[32,128], index: 1, kind: input, shape index: {}]
  %s2 = inlined_call_operand.hbm [shape: f32[32,256], index: 2, kind: input, shape index: {}]
  %s3 = inlined_call_operand.vmem [shape: f32[1,256], index: 3, kind: input, shape index: {}]
  %s4 = inlined_call_operand.hbm [shape: f32[8,256], index: 4, kind: output, shape index: {}]
  %s5 = sld [smem:[#allocation0]]
  $region46: #{tpu_custom_call.1} parent=0
    _
  %s7 = ssub.s32 1, %s5
  %s8 = scalar_select 0, %s7, %s5
  $region1: #{tpu_custom_call.1} parent=0
    #allocation4 [shape = 'u8[32768]{0}', space=vmem, size = 0x8000, scoped, tag = 'input window, operand 0, single buffered']
    #allocation5 [shape = 's32[1]{0}', space=sflag, size = 0x4, scoped, tag = 'scoped memory for tpu_custom_call.1']
    #allocation6 [shape = 's32[1]{0}', space=sflag, size = 0x4, scoped, tag = 'scoped memory for tpu_custom_call.1']
    #allocation7 [shape = 'u8[16384]{0}', space=vmem, size = 0x4000, scoped, tag = 'input window, operand 1, single buffered']
    #allocation8 [shape = 's32[1]{0}', space=sflag, size = 0x4, scoped, tag = 'scoped memory for tpu_custom_call.1']
    #allocation9 [shape = 'u8[32768]{0}', space=vmem, size = 0x8000, scoped, tag = 'input window, operand 2, single buffered']
    #allocation10 [shape = 'u8[8192]{0}', space=vmem, size = 0x2000, scoped, tag = 'output window, operand 0, single buffered']
    %9 = vsyncpa [#allocation5], 0
    %10 = vsyncpa [#allocation8], 0
    %11 = vsyncpa [#allocation6], 0
    // Predicated region
    $region2: #{tpu_custom_call.1} parent=1 // pred_check
      _
    $region3: #{tpu_custom_call.1} parent=1 // pred_check_branch
      %13 = sbr.rel (0) target = $region5
    $region4: #{tpu_custom_call.1} parent=1 // pred_region
      %15 = vsyncadd [#allocation5], 0
      %s16 = sshll.u32 %s0, 4
      %s17 = int_to_ptr.hbm [resolvable:$true] %s16
      %s18 = sshll.u32 [#allocation4], 4
      %s19 = int_to_ptr.vmem [resolvable:$true] %s18
      %24 = dma.hbm_to_vmem [thread:$0]  %s17, 1024, %s19, [#allocation5], 128, 128, 8
    $region5: #{tpu_custom_call.1} parent=1 // pred_fallthru
      _
    // Predicated region
    $region6: #{tpu_custom_call.1} parent=1 // pred_check
      _
    $region7: #{tpu_custom_call.1} parent=1 // pred_check_branch
      %26 = sbr.rel (0) target = $region9
    $region8: #{tpu_custom_call.1} parent=1 // pred_region
      %28 = vsyncadd [#allocation8], 0
      %s29 = sshll.u32 %s1, 4
      %s30 = int_to_ptr.hbm [resolvable:$true] %s29
      %s31 = sshll.u32 [#allocation7], 4
      %s32 = int_to_ptr.vmem [resolvable:$true] %s31
      %37 = dma.hbm_to_vmem [thread:$0]  %s30, 512, %s32, [#allocation8], 128, 128, 8
    $region9: #{tpu_custom_call.1} parent=1 // pred_fallthru
      _
    // Predicated region
    $region10: #{tpu_custom_call.1} parent=1 // pred_check
      _
    $region11: #{tpu_custom_call.1} parent=1 // pred_check_branch
      %39 = sbr.rel (0) target = $region13
    $region12: #{tpu_custom_call.1} parent=1 // pred_region
      %41 = vsyncadd [#allocation8], 0
      %s42 = sshll.u32 %s2, 4
      %s43 = int_to_ptr.hbm [resolvable:$true] %s42
      %s44 = sshll.u32 [#allocation9], 4
      %s45 = int_to_ptr.vmem [resolvable:$true] %s44
      %50 = dma.hbm_to_vmem [thread:$0]  %s43, 1024, %s45, [#allocation8], 256, 256, 16
    $region13: #{tpu_custom_call.1} parent=1 // pred_fallthru
      _
    // Predicated region
    $region14: #{tpu_custom_call.1} parent=1 // pred_check
      _
    $region15: #{tpu_custom_call.1} parent=1 // pred_check_branch
      %52 = sbr.rel (0) target = $region17
    $region16: #{tpu_custom_call.1} parent=1 // pred_region
      _
    $region17: #{tpu_custom_call.1} parent=1 // pred_fallthru
      _
    // Predicated region
    $region18: #{tpu_custom_call.1} parent=1 // pred_check
      _
    $region19: #{tpu_custom_call.1} parent=1 // pred_check_branch
      %54 = sbr.rel (0) target = $region21
    $region20: #{tpu_custom_call.1} parent=1 // pred_region
      %56 = dma.done [#allocation5], 1024
    $region21: #{tpu_custom_call.1} parent=1 // pred_fallthru
      _
    // Predicated region
    $region22: #{tpu_custom_call.1} parent=1 // pred_check
      _
    $region23: #{tpu_custom_call.1} parent=1 // pred_check_branch
      %58 = sbr.rel (0) target = $region25
    $region24: #{tpu_custom_call.1} parent=1 // pred_region
      %60 = dma.done [#allocation8], 512
    $region25: #{tpu_custom_call.1} parent=1 // pred_fallthru
      _
    // Predicated region
    $region26: #{tpu_custom_call.1} parent=1 // pred_check
      _
    $region27: #{tpu_custom_call.1} parent=1 // pred_check_branch
      %62 = sbr.rel (0) target = $region29
    $region28: #{tpu_custom_call.1} parent=1 // pred_region
      %64 = dma.done [#allocation8], 1024
    $region29: #{tpu_custom_call.1} parent=1 // pred_fallthru
      _
    %p65 = scmp.eq.s32.totalorder 0, 0
    // Predicated region
    $region30: #{tpu_custom_call.1} parent=1 // pred_check
      %p66 = pneg %p65
    $region31: #{tpu_custom_call.1} parent=1 // pred_check_branch
      %68 = sbr.rel (%p66) target = $region33
    $region32: #{tpu_custom_call.1} parent=1 // pred_region
      %vm69 = vcmask 261120
      %70 = vst.msk [vmem:[#allocation2] sm:$0xff] %vm69, 0.0
      %71 = vst.msk [vmem:[#allocation3] sm:$0xff] %vm69, 0.0
    $region33: #{tpu_custom_call.1} parent=1 // pred_fallthru
      _
    %v72 = vld [vmem:[#allocation7] sm:$0xff]
    %v73 = vld [vmem:[#allocation7 + $0x8] sm:$0xff]
    %v74 = vld [vmem:[#allocation7 + $0x10] sm:$0xff]
    %v75 = vld [vmem:[#allocation7 + $0x18] sm:$0xff]
    %v76 = vld [vmem:[#allocation2] sm:$0xff]
    %v77 = vld [vmem:[#allocation3] sm:$0xff]
    %v78 = vld [vmem:[#allocation4] sm:$0xff]
    %vm79 = vcmask 261120
    %v81 = vsel %vm79, %v76, 0
    %83 = vmatpush.msra.mxu0 0.0
    %84 = vmatpush.msra.mxu0 0.0
    %85 = vmatpush.msra.mxu0 0.0
    %86 = vmatpush.msra.mxu0 0.0
    %87 = vmatpush.msra.mxu0 0.0
    %88 = vmatpush.msra.mxu0 0.0
    %89 = vmatpush.msra.mxu0 0.0
    %90 = vmatpush.msra.mxu0 0.0
    %91 = vmatpush.msra.mxu0 0.0
    %92 = vmatpush.msra.mxu0 0.0
    %93 = vmatpush.msra.mxu0 0.0
    %94 = vmatpush.msra.mxu0 0.0
    %95 = vmatpush.msra.mxu0 %v75
    %96 = vmatpush.msra.mxu0 %v74
    %97 = vmatpush.msra.mxu0 %v73
    %98 = vmatpush.msra.mxu0 %v72
    %99 = vmatmul.f32.gmra.mxu0 %v81
    %v100 = vpop.f32.mrf.mxu0
    %v101 = vadd.f32 0.0, %v100
    %102 = vdwg.mxu0
    %v103 = vadd.f32 %v78, %v101
    %v104 = vxor.u32 %v103, 2147483648
    %v105 = vmul.f32 %v104, 1.442695
    %v106 = vpow.pop %v105
    %v107 = vadd.f32 %v106, 1.0
    %v108 = vrcp.pop %v107
    %v109 = vmul.f32 %v107, %v108
    %v110 = vsub.f32 1.0, %v109
    %v111 = vmul.f32 %v108, %v110
    %v112 = vadd.f32 %v108, %v111
    %vm113 = vweird.f32 %v107
    %vm114 = vweird.f32 %v108
    %vm115 = vmor %vm113, %vm114
    %v116 = vsel %vm115, %v108, %v112
    %v117 = vand.u32 2147483647, %v107
    %vm118 = vcmp.eq.f32.partialorder %v117, 8.507059e+37
    %v119 = vand.u32 %v107, 2147483648
    %v120 = vor.u32 1.1754944e-38, %v119
    %v121 = vsel %vm118, %v120, %v116
    %v122 = vmul.f32 1.0, %v121
    %v123 = vtanh.pop %v103
    %125 = vrot.lane.b32.xlu0 %v77, 32
    %v126 = vpop.permute.xlu0 %125
    %v128 = vmul.f32 %v122, %v126
    %130 = vrot.lane.b32.xlu0 %v123, 64
    %v131 = vpop.permute.xlu0 %130
    %v133 = vmul.f32 %v122, %v131
    %135 = vrot.lane.b32.xlu0 %v133, 32
    %v136 = vpop.permute.xlu0 %135
    %v138 = vadd.f32 %v128, %v136
    %v139 = vtanh.pop %v138
    %141 = vrot.lane.b32.xlu0 %v139, 64
    %v142 = vpop.permute.xlu0 %141
    %v144 = vmul.f32 %v122, %v142
    %s145 = scalar_lea.vmem [#allocation4], 8
    %v146 = vld [vmem:[%s145] sm:$0xff]
    %148 = vrot.lane.b32.xlu0 %v144, 32
    %v149 = vpop.permute.xlu0 %148
    %v150 = vsel %vm79, %v149, 0
    %152 = vmatpush.msra.mxu0 0.0
    %153 = vmatpush.msra.mxu0 0.0
    %154 = vmatpush.msra.mxu0 0.0
    %155 = vmatpush.msra.mxu0 0.0
    %156 = vmatpush.msra.mxu0 0.0
    %157 = vmatpush.msra.mxu0 0.0
    %158 = vmatpush.msra.mxu0 0.0
    %159 = vmatpush.msra.mxu0 0.0
    %160 = vmatpush.msra.mxu0 0.0
    %161 = vmatpush.msra.mxu0 0.0
    %162 = vmatpush.msra.mxu0 0.0
    %163 = vmatpush.msra.mxu0 0.0
    %164 = vmatpush.msra.mxu0 %v75
    %165 = vmatpush.msra.mxu0 %v74
    %166 = vmatpush.msra.mxu0 %v73
    %167 = vmatpush.msra.mxu0 %v72
    %168 = vmatmul.f32.gmra.mxu0 %v150
    %v169 = vpop.f32.mrf.mxu0
    %v170 = vadd.f32 0.0, %v169
    %171 = vdwg.mxu0
    %v172 = vadd.f32 %v146, %v170
    %v173 = vxor.u32 %v172, 2147483648
    %v174 = vmul.f32 %v173, 1.442695
    %v175 = vpow.pop %v174
    %v176 = vadd.f32 %v175, 1.0
    %v177 = vrcp.pop %v176
    %v178 = vmul.f32 %v176, %v177
    %v179 = vsub.f32 1.0, %v178
    %v180 = vmul.f32 %v177, %v179
    %v181 = vadd.f32 %v177, %v180
    %vm182 = vweird.f32 %v176
    %vm183 = vweird.f32 %v177
    %vm184 = vmor %vm182, %vm183
    %v185 = vsel %vm184, %v177, %v181
    %v186 = vand.u32 2147483647, %v176
    %vm187 = vcmp.eq.f32.partialorder %v186, 8.507059e+37
    %v188 = vand.u32 %v176, 2147483648
    %v189 = vor.u32 1.1754944e-38, %v188
    %v190 = vsel %vm187, %v189, %v185
    %v191 = vmul.f32 1.0, %v190
    %v192 = vtanh.pop %v172
    %v193 = vmul.f32 %v191, %v138
    %195 = vrot.lane.b32.xlu0 %v192, 64
    %v196 = vpop.permute.xlu0 %195
    %v198 = vmul.f32 %v191, %v196
    %200 = vrot.lane.b32.xlu0 %v198, 32
    %v201 = vpop.permute.xlu0 %200
    %v203 = vadd.f32 %v193, %v201
    %v204 = vtanh.pop %v203
    %206 = vrot.lane.b32.xlu0 %v204, 64
    %v207 = vpop.permute.xlu0 %206
    %v209 = vmul.f32 %v191, %v207
    %s210 = scalar_lea.vmem [#allocation4], 16
    %v211 = vld [vmem:[%s210] sm:$0xff]
    %213 = vrot.lane.b32.xlu0 %v209, 32
    %v214 = vpop.permute.xlu0 %213
    %v215 = vsel %vm79, %v214, 0
    %217 = vmatpush.msra.mxu0 0.0
    %218 = vmatpush.msra.mxu0 0.0
    %219 = vmatpush.msra.mxu0 0.0
    %220 = vmatpush.msra.mxu0 0.0
    %221 = vmatpush.msra.mxu0 0.0
    %222 = vmatpush.msra.mxu0 0.0
    %223 = vmatpush.msra.mxu0 0.0
    %224 = vmatpush.msra.mxu0 0.0
    %225 = vmatpush.msra.mxu0 0.0
    %226 = vmatpush.msra.mxu0 0.0
    %227 = vmatpush.msra.mxu0 0.0
    %228 = vmatpush.msra.mxu0 0.0
    %229 = vmatpush.msra.mxu0 %v75
    %230 = vmatpush.msra.mxu0 %v74
    %231 = vmatpush.msra.mxu0 %v73
    %232 = vmatpush.msra.mxu0 %v72
    %233 = vmatmul.f32.gmra.mxu0 %v215
    %v234 = vpop.f32.mrf.mxu0
    %v235 = vadd.f32 0.0, %v234
    %236 = vdwg.mxu0
    %v237 = vadd.f32 %v211, %v235
    %v238 = vxor.u32 %v237, 2147483648
    %v239 = vmul.f32 %v238, 1.442695
    %v240 = vpow.pop %v239
    %v241 = vadd.f32 %v240, 1.0
    %v242 = vrcp.pop %v241
    %v243 = vmul.f32 %v241, %v242
    %v244 = vsub.f32 1.0, %v243
    %v245 = vmul.f32 %v242, %v244
    %v246 = vadd.f32 %v242, %v245
    %vm247 = vweird.f32 %v241
    %vm248 = vweird.f32 %v242
    %vm249 = vmor %vm247, %vm248
    %v250 = vsel %vm249, %v242, %v246
    %v251 = vand.u32 2147483647, %v241
    %vm252 = vcmp.eq.f32.partialorder %v251, 8.507059e+37
    %v253 = vand.u32 %v241, 2147483648
    %v254 = vor.u32 1.1754944e-38, %v253
    %v255 = vsel %vm252, %v254, %v250
    %v256 = vmul.f32 1.0, %v255
    %v257 = vtanh.pop %v237
    %v258 = vmul.f32 %v256, %v203
    %260 = vrot.lane.b32.xlu0 %v257, 64
    %v261 = vpop.permute.xlu0 %260
    %v263 = vmul.f32 %v256, %v261
    %265 = vrot.lane.b32.xlu0 %v263, 32
    %v266 = vpop.permute.xlu0 %265
    %v268 = vadd.f32 %v258, %v266
    %v269 = vtanh.pop %v268
    %271 = vrot.lane.b32.xlu0 %v269, 64
    %v272 = vpop.permute.xlu0 %271
    %v274 = vmul.f32 %v256, %v272
    %s275 = scalar_lea.vmem [#allocation4], 24
    %v276 = vld [vmem:[%s275] sm:$0xff]
    %278 = vrot.lane.b32.xlu0 %v274, 32
    %v279 = vpop.permute.xlu0 %278
    %v280 = vsel %vm79, %v279, 0
    %282 = vmatpush.msra.mxu0 0.0
    %283 = vmatpush.msra.mxu0 0.0
    %284 = vmatpush.msra.mxu0 0.0
    %285 = vmatpush.msra.mxu0 0.0
    %286 = vmatpush.msra.mxu0 0.0
    %287 = vmatpush.msra.mxu0 0.0
    %288 = vmatpush.msra.mxu0 0.0
    %289 = vmatpush.msra.mxu0 0.0
    %290 = vmatpush.msra.mxu0 0.0
    %291 = vmatpush.msra.mxu0 0.0
    %292 = vmatpush.msra.mxu0 0.0
    %293 = vmatpush.msra.mxu0 0.0
    %294 = vmatpush.msra.mxu0 %v75
    %295 = vmatpush.msra.mxu0 %v74
    %296 = vmatpush.msra.mxu0 %v73
    %297 = vmatpush.msra.mxu0 %v72
    %298 = vmatmul.f32.gmra.mxu0 %v280
    %v299 = vpop.f32.mrf.mxu0
    %v300 = vadd.f32 0.0, %v299
    %301 = vdwg.mxu0
    %v302 = vadd.f32 %v276, %v300
    %v303 = vxor.u32 %v302, 2147483648
    %v304 = vmul.f32 %v303, 1.442695
    %v305 = vpow.pop %v304
    %v306 = vadd.f32 %v305, 1.0
    %v307 = vrcp.pop %v306
    %v308 = vmul.f32 %v306, %v307
    %v309 = vsub.f32 1.0, %v308
    %v310 = vmul.f32 %v307, %v309
    %v311 = vadd.f32 %v307, %v310
    %vm312 = vweird.f32 %v306
    %vm313 = vweird.f32 %v307
    %vm314 = vmor %vm312, %vm313
    %v315 = vsel %vm314, %v307, %v311
    %v316 = vand.u32 2147483647, %v306
    %vm317 = vcmp.eq.f32.partialorder %v316, 8.507059e+37
    %v318 = vand.u32 %v306, 2147483648
    %v319 = vor.u32 1.1754944e-38, %v318
    %v320 = vsel %vm317, %v319, %v315
    %v321 = vmul.f32 1.0, %v320
    %v322 = vtanh.pop %v302
    %v323 = vmul.f32 %v321, %v268
    %325 = vrot.lane.b32.xlu0 %v322, 64
    %v326 = vpop.permute.xlu0 %325
    %v328 = vmul.f32 %v321, %v326
    %330 = vrot.lane.b32.xlu0 %v328, 32
    %v331 = vpop.permute.xlu0 %330
    %v333 = vadd.f32 %v323, %v331
    %v334 = vtanh.pop %v333
    %336 = vrot.lane.b32.xlu0 %v334, 64
    %v337 = vpop.permute.xlu0 %336
    %v339 = vmul.f32 %v321, %v337
    %s340 = scalar_lea.vmem [#allocation4], 32
    %v341 = vld [vmem:[%s340] sm:$0xff]
    %343 = vrot.lane.b32.xlu0 %v339, 32
    %v344 = vpop.permute.xlu0 %343
    %v345 = vsel %vm79, %v344, 0
    %347 = vmatpush.msra.mxu0 0.0
    %348 = vmatpush.msra.mxu0 0.0
    %349 = vmatpush.msra.mxu0 0.0
    %350 = vmatpush.msra.mxu0 0.0
    %351 = vmatpush.msra.mxu0 0.0
    %352 = vmatpush.msra.mxu0 0.0
    %353 = vmatpush.msra.mxu0 0.0
    %354 = vmatpush.msra.mxu0 0.0
    %355 = vmatpush.msra.mxu0 0.0
    %356 = vmatpush.msra.mxu0 0.0
    %357 = vmatpush.msra.mxu0 0.0
    %358 = vmatpush.msra.mxu0 0.0
    %359 = vmatpush.msra.mxu0 %v75
    %360 = vmatpush.msra.mxu0 %v74
    %361 = vmatpush.msra.mxu0 %v73
    %362 = vmatpush.msra.mxu0 %v72
    %363 = vmatmul.f32.gmra.mxu0 %v345
    %v364 = vpop.f32.mrf.mxu0
    %v365 = vadd.f32 0.0, %v364
    %366 = vdwg.mxu0
    %v367 = vadd.f32 %v341, %v365
    %v368 = vxor.u32 %v367, 2147483648
    %v369 = vmul.f32 %v368, 1.442695
    %v370 = vpow.pop %v369
    %v371 = vadd.f32 %v370, 1.0
    %v372 = vrcp.pop %v371
    %v373 = vmul.f32 %v371, %v372
    %v374 = vsub.f32 1.0, %v373
    %v375 = vmul.f32 %v372, %v374
    %v376 = vadd.f32 %v372, %v375
    %vm377 = vweird.f32 %v371
    %vm378 = vweird.f32 %v372
    %vm379 = vmor %vm377, %vm378
    %v380 = vsel %vm379, %v372, %v376
    %v381 = vand.u32 2147483647, %v371
    %vm382 = vcmp.eq.f32.partialorder %v381, 8.507059e+37
    %v383 = vand.u32 %v371, 2147483648
    %v384 = vor.u32 1.1754944e-38, %v383
    %v385 = vsel %vm382, %v384, %v380
    %v386 = vmul.f32 1.0, %v385
    %v387 = vtanh.pop %v367
    %v388 = vmul.f32 %v386, %v333
    %390 = vrot.lane.b32.xlu0 %v387, 64
    %v391 = vpop.permute.xlu0 %390
    %v393 = vmul.f32 %v386, %v391
    %395 = vrot.lane.b32.xlu0 %v393, 32
    %v396 = vpop.permute.xlu0 %395
    %v398 = vadd.f32 %v388, %v396
    %v399 = vtanh.pop %v398
    %401 = vrot.lane.b32.xlu0 %v399, 64
    %v402 = vpop.permute.xlu0 %401
    %v404 = vmul.f32 %v386, %v402
    %s405 = scalar_lea.vmem [#allocation4], 40
    %v406 = vld [vmem:[%s405] sm:$0xff]
    %408 = vrot.lane.b32.xlu0 %v404, 32
    %v409 = vpop.permute.xlu0 %408
    %v410 = vsel %vm79, %v409, 0
    %412 = vmatpush.msra.mxu0 0.0
    %413 = vmatpush.msra.mxu0 0.0
    %414 = vmatpush.msra.mxu0 0.0
    %415 = vmatpush.msra.mxu0 0.0
    %416 = vmatpush.msra.mxu0 0.0
    %417 = vmatpush.msra.mxu0 0.0
    %418 = vmatpush.msra.mxu0 0.0
    %419 = vmatpush.msra.mxu0 0.0
    %420 = vmatpush.msra.mxu0 0.0
    %421 = vmatpush.msra.mxu0 0.0
    %422 = vmatpush.msra.mxu0 0.0
    %423 = vmatpush.msra.mxu0 0.0
    %424 = vmatpush.msra.mxu0 %v75
    %425 = vmatpush.msra.mxu0 %v74
    %426 = vmatpush.msra.mxu0 %v73
    %427 = vmatpush.msra.mxu0 %v72
    %428 = vmatmul.f32.gmra.mxu0 %v410
    %v429 = vpop.f32.mrf.mxu0
    %v430 = vadd.f32 0.0, %v429
    %431 = vdwg.mxu0
    %v432 = vadd.f32 %v406, %v430
    %v433 = vxor.u32 %v432, 2147483648
    %v434 = vmul.f32 %v433, 1.442695
    %v435 = vpow.pop %v434
    %v436 = vadd.f32 %v435, 1.0
    %v437 = vrcp.pop %v436
    %v438 = vmul.f32 %v436, %v437
    %v439 = vsub.f32 1.0, %v438
    %v440 = vmul.f32 %v437, %v439
    %v441 = vadd.f32 %v437, %v440
    %vm442 = vweird.f32 %v436
    %vm443 = vweird.f32 %v437
    %vm444 = vmor %vm442, %vm443
    %v445 = vsel %vm444, %v437, %v441
    %v446 = vand.u32 2147483647, %v436
    %vm447 = vcmp.eq.f32.partialorder %v446, 8.507059e+37
    %v448 = vand.u32 %v436, 2147483648
    %v449 = vor.u32 1.1754944e-38, %v448
    %v450 = vsel %vm447, %v449, %v445
    %v451 = vmul.f32 1.0, %v450
    %v452 = vtanh.pop %v432
    %v453 = vmul.f32 %v451, %v398
    %455 = vrot.lane.b32.xlu0 %v452, 64
    %v456 = vpop.permute.xlu0 %455
    %v458 = vmul.f32 %v451, %v456
    %460 = vrot.lane.b32.xlu0 %v458, 32
    %v461 = vpop.permute.xlu0 %460
    %v463 = vadd.f32 %v453, %v461
    %v464 = vtanh.pop %v463
    %466 = vrot.lane.b32.xlu0 %v464, 64
    %v467 = vpop.permute.xlu0 %466
    %v469 = vmul.f32 %v451, %v467
    %s470 = scalar_lea.vmem [#allocation4], 48
    %v471 = vld [vmem:[%s470] sm:$0xff]
    %473 = vrot.lane.b32.xlu0 %v469, 32
    %v474 = vpop.permute.xlu0 %473
    %v475 = vsel %vm79, %v474, 0
    %477 = vmatpush.msra.mxu0 0.0
    %478 = vmatpush.msra.mxu0 0.0
    %479 = vmatpush.msra.mxu0 0.0
    %480 = vmatpush.msra.mxu0 0.0
    %481 = vmatpush.msra.mxu0 0.0
    %482 = vmatpush.msra.mxu0 0.0
    %483 = vmatpush.msra.mxu0 0.0
    %484 = vmatpush.msra.mxu0 0.0
    %485 = vmatpush.msra.mxu0 0.0
    %486 = vmatpush.msra.mxu0 0.0
    %487 = vmatpush.msra.mxu0 0.0
    %488 = vmatpush.msra.mxu0 0.0
    %489 = vmatpush.msra.mxu0 %v75
    %490 = vmatpush.msra.mxu0 %v74
    %491 = vmatpush.msra.mxu0 %v73
    %492 = vmatpush.msra.mxu0 %v72
    %493 = vmatmul.f32.gmra.mxu0 %v475
    %v494 = vpop.f32.mrf.mxu0
    %v495 = vadd.f32 0.0, %v494
    %496 = vdwg.mxu0
    %v497 = vadd.f32 %v471, %v495
    %v498 = vxor.u32 %v497, 2147483648
    %v499 = vmul.f32 %v498, 1.442695
    %v500 = vpow.pop %v499
    %v501 = vadd.f32 %v500, 1.0
    %v502 = vrcp.pop %v501
    %v503 = vmul.f32 %v501, %v502
    %v504 = vsub.f32 1.0, %v503
    %v505 = vmul.f32 %v502, %v504
    %v506 = vadd.f32 %v502, %v505
    %vm507 = vweird.f32 %v501
    %vm508 = vweird.f32 %v502
    %vm509 = vmor %vm507, %vm508
    %v510 = vsel %vm509, %v502, %v506
    %v511 = vand.u32 2147483647, %v501
    %vm512 = vcmp.eq.f32.partialorder %v511, 8.507059e+37
    %v513 = vand.u32 %v501, 2147483648
    %v514 = vor.u32 1.1754944e-38, %v513
    %v515 = vsel %vm512, %v514, %v510
    %v516 = vmul.f32 1.0, %v515
    %v517 = vtanh.pop %v497
    %v518 = vmul.f32 %v516, %v463
    %520 = vrot.lane.b32.xlu0 %v517, 64
    %v521 = vpop.permute.xlu0 %520
    %v523 = vmul.f32 %v516, %v521
    %525 = vrot.lane.b32.xlu0 %v523, 32
    %v526 = vpop.permute.xlu0 %525
    %v528 = vadd.f32 %v518, %v526
    %v529 = vtanh.pop %v528
    %531 = vrot.lane.b32.xlu0 %v529, 64
    %v532 = vpop.permute.xlu0 %531
    %v534 = vmul.f32 %v516, %v532
    %s535 = scalar_lea.vmem [#allocation4], 56
    %v536 = vld [vmem:[%s535] sm:$0xff]
    %538 = vrot.lane.b32.xlu0 %v534, 32
    %v539 = vpop.permute.xlu0 %538
    %v540 = vsel %vm79, %v539, 0
    %542 = vmatpush.msra.mxu0 0.0
    %543 = vmatpush.msra.mxu0 0.0
    %544 = vmatpush.msra.mxu0 0.0
    %545 = vmatpush.msra.mxu0 0.0
    %546 = vmatpush.msra.mxu0 0.0
    %547 = vmatpush.msra.mxu0 0.0
    %548 = vmatpush.msra.mxu0 0.0
    %549 = vmatpush.msra.mxu0 0.0
    %550 = vmatpush.msra.mxu0 0.0
    %551 = vmatpush.msra.mxu0 0.0
    %552 = vmatpush.msra.mxu0 0.0
    %553 = vmatpush.msra.mxu0 0.0
    %554 = vmatpush.msra.mxu0 %v75
    %555 = vmatpush.msra.mxu0 %v74
    %556 = vmatpush.msra.mxu0 %v73
    %557 = vmatpush.msra.mxu0 %v72
    %558 = vmatmul.f32.gmra.mxu0 %v540
    %v559 = vpop.f32.mrf.mxu0
    %v560 = vadd.f32 0.0, %v559
    %561 = vdwg.mxu0
    %v562 = vadd.f32 %v536, %v560
    %v563 = vxor.u32 %v562, 2147483648
    %v564 = vmul.f32 %v563, 1.442695
    %v565 = vpow.pop %v564
    %v566 = vadd.f32 %v565, 1.0
    %v567 = vrcp.pop %v566
    %v568 = vmul.f32 %v566, %v567
    %v569 = vsub.f32 1.0, %v568
    %v570 = vmul.f32 %v567, %v569
    %v571 = vadd.f32 %v567, %v570
    %vm572 = vweird.f32 %v566
    %vm573 = vweird.f32 %v567
    %vm574 = vmor %vm572, %vm573
    %v575 = vsel %vm574, %v567, %v571
    %v576 = vand.u32 2147483647, %v566
    %vm577 = vcmp.eq.f32.partialorder %v576, 8.507059e+37
    %v578 = vand.u32 %v566, 2147483648
    %v579 = vor.u32 1.1754944e-38, %v578
    %v580 = vsel %vm577, %v579, %v575
    %v581 = vmul.f32 1.0, %v580
    %v582 = vtanh.pop %v562
    %v583 = vmul.f32 %v581, %v528
    %585 = vrot.lane.b32.xlu0 %v582, 64
    %v586 = vpop.permute.xlu0 %585
    %v588 = vmul.f32 %v581, %v586
    %590 = vrot.lane.b32.xlu0 %v588, 32
    %v591 = vpop.permute.xlu0 %590
    %v593 = vadd.f32 %v583, %v591
    %v594 = vtanh.pop %v593
    %596 = vrot.lane.b32.xlu0 %v594, 64
    %v597 = vpop.permute.xlu0 %596
    %v599 = vmul.f32 %v581, %v597
    %601 = vrot.lane.b32.xlu0 %v599, 32
    %v602 = vpop.permute.xlu0 %601
    %604 = vst.msk [vmem:[#allocation2] sm:$0xff] %vm79, %v602
    %606 = vrot.lane.b32.xlu0 %v593, 96
    %v607 = vpop.permute.xlu0 %606
    %609 = vst.msk [vmem:[#allocation3] sm:$0xff] %vm79, %v607
    // Predicated region
    $region34: #{tpu_custom_call.1} parent=1 // pred_check
      %p610 = pneg %p65
    $region35: #{tpu_custom_call.1} parent=1 // pred_check_branch
      %612 = sbr.rel (%p610) target = $region37
    $region36: #{tpu_custom_call.1} parent=1 // pred_region
      %v613 = vld [vmem:[#allocation9] sm:$0xff]
      %v614 = vld [vmem:[#allocation9 + $0x8] sm:$0xff]
      %v615 = vld [vmem:[#allocation9 + $0x10] sm:$0xff]
      %v616 = vld [vmem:[#allocation9 + $0x18] sm:$0xff]
      %v617 = vld [vmem:[#allocation9 + $0x20] sm:$0xff]
      %v618 = vld [vmem:[#allocation9 + $0x28] sm:$0xff]
      %v619 = vld [vmem:[#allocation9 + $0x30] sm:$0xff]
      %v620 = vld [vmem:[#allocation9 + $0x38] sm:$0xff]
      %v621 = vld [vmem:[%s3] sm:$0x3]
      %v623 = vperm.slane %v621, 0
      %v624 = vperm.slane %v621, 1
      %v627 = vsel %vm79, %v602, 0
      %629 = vmatpush.msra.mxu0 0.0
      %630 = vmatpush.msra.mxu0 0.0
      %631 = vmatpush.msra.mxu0 0.0
      %632 = vmatpush.msra.mxu0 0.0
      %633 = vmatpush.msra.mxu0 0.0
      %634 = vmatpush.msra.mxu0 0.0
      %635 = vmatpush.msra.mxu0 0.0
      %636 = vmatpush.msra.mxu0 0.0
      %637 = vmatpush.msra.mxu0 0.0
      %638 = vmatpush.msra.mxu0 0.0
      %639 = vmatpush.msra.mxu0 0.0
      %640 = vmatpush.msra.mxu0 0.0
      %641 = vmatpush.msra.mxu0 %v619
      %642 = vmatpush.msra.mxu0 %v617
      %643 = vmatpush.msra.mxu0 %v615
      %644 = vmatpush.msra.mxu0 %v613
      %645 = vmatmul.f32.gmra.mxu0 %v627
      %v646 = vpop.f32.mrf.mxu0
      %v647 = vadd.f32 %v623, %v646
      %648 = vdwg.mxu0
      %649 = vmatpush.msra.mxu0 0.0
      %650 = vmatpush.msra.mxu0 0.0
      %651 = vmatpush.msra.mxu0 0.0
      %652 = vmatpush.msra.mxu0 0.0
      %653 = vmatpush.msra.mxu0 0.0
      %654 = vmatpush.msra.mxu0 0.0
      %655 = vmatpush.msra.mxu0 0.0
      %656 = vmatpush.msra.mxu0 0.0
      %657 = vmatpush.msra.mxu0 0.0
      %658 = vmatpush.msra.mxu0 0.0
      %659 = vmatpush.msra.mxu0 0.0
      %660 = vmatpush.msra.mxu0 0.0
      %661 = vmatpush.msra.mxu0 %v620
      %662 = vmatpush.msra.mxu0 %v618
      %663 = vmatpush.msra.mxu0 %v616
      %664 = vmatpush.msra.mxu0 %v614
      %665 = vmatmul.f32.gmra.mxu0 %v627
      %v666 = vpop.f32.mrf.mxu0
      %v667 = vadd.f32 %v624, %v666
      %668 = vdwg.mxu0
      %v669 = vmax.f32 %v647, 0.0
      %v670 = vmax.f32 %v667, 0.0
      %671 = vst [vmem:[#allocation10] sm:$0xff] %v669
      %672 = vst [vmem:[#allocation10 + $0x8] sm:$0xff] %v670
    $region37: #{tpu_custom_call.1} parent=1 // pred_fallthru
      _
    // Predicated region
    $region38: #{tpu_custom_call.1} parent=1 // pred_check
      _
    $region39: #{tpu_custom_call.1} parent=1 // pred_check_branch
      %674 = sbr.rel (0) target = $region41
    $region40: #{tpu_custom_call.1} parent=1 // pred_region
      %676 = vsyncadd [#allocation6], 0
      %s678 = sshll.u32 [#allocation10], 4
      %s679 = int_to_ptr.vmem [resolvable:$true] %s678
      %s680 = sshll.u32 %s4, 4
      %s681 = int_to_ptr.hbm [resolvable:$true] %s680
      %683 = dma.vmem_to_hbm [thread:$0]  %s679, 256, %s681, [#allocation6]
    $region41: #{tpu_custom_call.1} parent=1 // pred_fallthru
      _
    // Predicated region
    $region42: #{tpu_custom_call.1} parent=1 // pred_check
      _
    $region43: #{tpu_custom_call.1} parent=1 // pred_check_branch
      %685 = sbr.rel (0) target = $region45
    $region44: #{tpu_custom_call.1} parent=1 // pred_region
      %687 = dma.done [#allocation6], 256
    $region45: #{tpu_custom_call.1} parent=1 // pred_fallthru
      _
    %688 = vsyncpa [#allocation5], 1
    %689 = vsyncpa [#allocation8], 1
    %690 = vsyncpa [#allocation6], 1

</llo_original>
